<compile_context>
chip_gen: v7x
topology: tpu7x:2x2x1
jax: 0.10.0
libtpu: 0.0.40
codegen_flags: <defaults>
</compile_context>

<pallas_src>
import functools
import math

import jax
import jax.numpy as jnp
from jax.experimental import pallas as pl
from jax.experimental.pallas import tpu as pltpu


def _block_attn_kernel(x_ref, mask_ref, wq_ref, wkv_ref, wo_ref, ln1_ref,
                       ln2_ref, wgu_ref, wd_ref, o_ref, kv_ref,
                       *, n_head, head_dim, hidden, inter, tq, eps):
    f32 = jnp.float32
    bf16 = jnp.bfloat16
    H, Dh, I = hidden, head_dim, inter
    qi = pl.program_id(1)

    ln1 = ln1_ref[...]  # (1, H) f32

    def rms_norm(v, w):
        var = jnp.mean(v * v, axis=-1, keepdims=True)
        return v * jax.lax.rsqrt(var + eps) * w

    # ---- once per batch element (qi == 0): project K|V for the full sequence
    #      with one full-width matmul and cache it (bf16) in VMEM scratch ----
    @pl.when(qi == 0)
    def _():
        x_full = x_ref[0].astype(f32)                             # (S, H)
        h_full = rms_norm(x_full, ln1).astype(bf16)               # (S, H) bf16
        kv = jnp.dot(h_full, wkv_ref[...],
                     preferred_element_type=f32)                  # (S, 2H) f32
        kv_ref[...] = kv.astype(bf16)

    # ---- per query tile ----
    row0 = pl.multiple_of(qi * tq, tq)
    x_tile = x_ref[0, pl.ds(row0, tq), :].astype(f32)             # (tq, H)
    h1 = rms_norm(x_tile, ln1)

    # Q projection; 1/sqrt(Dh) is pre-folded into wq.
    q = jnp.dot(h1.astype(bf16), wq_ref[...],
                preferred_element_type=f32)                       # (tq, H)
    qb = q.astype(bf16)

    # PyTorch: attn_mask[attn_mask == 0] = finfo(f32).min; nonzeros added as-is.
    mask = mask_ref[0].astype(f32)                                # (tq, S)
    neg_inf = jnp.float32(jnp.finfo(jnp.float32).min)
    add_mask = jnp.where(mask == 0.0, neg_inf, mask)

    # ---- attention: per-head scores / softmax / PV on bf16 tiles, then one
    #      full-width out-proj on the lane-dense concatenated output ----
    head_outs = []
    for hd in range(n_head):
        q_h = qb[:, hd * Dh:(hd + 1) * Dh]                        # (tq, Dh) bf16
        k_h = kv_ref[:, hd * Dh:(hd + 1) * Dh]                    # (S, Dh)  bf16
        v_h = kv_ref[:, H + hd * Dh:H + (hd + 1) * Dh]            # (S, Dh)  bf16
        s = jax.lax.dot_general(q_h, k_h, (((1,), (1,)), ((), ())),
                                preferred_element_type=f32)       # (tq, S)
        s = s + add_mask
        s = s - jnp.max(s, axis=-1, keepdims=True)
        e = jnp.exp(s)
        p = e * pl.reciprocal(jnp.sum(e, axis=-1, keepdims=True), approx=True)
        head_outs.append(jnp.dot(p.astype(bf16), v_h,
                                 preferred_element_type=f32))     # (tq, Dh)
    attn_cat = jnp.concatenate(head_outs, axis=-1)                # (tq, H)
    attn_out = jnp.dot(attn_cat.astype(bf16), wo_ref[...],
                       preferred_element_type=f32)                # (tq, H)

    out1 = attn_out + x_tile                                      # residual

    # ---- post-attention RMSNorm + SwiGLU MLP (fused gate|up matmul) ----
    h2 = rms_norm(out1, ln2_ref[...])
    gu = jnp.dot(h2.astype(bf16), wgu_ref[...],
                 preferred_element_type=f32)                      # (tq, 2I)
    gate = gu[:, :I]
    up = gu[:, I:]
    act = gate * jax.nn.sigmoid(gate) * up                        # SiLU(gate)*up
    mlp = jnp.dot(act.astype(bf16), wd_ref[...],
                  preferred_element_type=f32)                     # (tq, H)

    o_ref[0] = (out1 + mlp).astype(o_ref.dtype)


def _prepare_kernel_params(p, n_head):
    """Pre-cast / fuse weights for the kernel (bf16, transposed, scale folded)."""
    H = p["wq_t"].shape[0]
    Dh = H // n_head
    bf16 = jnp.bfloat16
    wq_b = (p["wq_t"] * (1.0 / math.sqrt(Dh))).astype(bf16)       # (H, H)
    wkv_b = jnp.concatenate([p["wk_t"], p["wv_t"]], axis=1).astype(bf16)  # (H, 2H)
    wo_b = p["wo_t"].astype(bf16)                                 # (H, H)
    wgu_b = jnp.concatenate([p["wg_t"], p["wu_t"]], axis=1).astype(bf16)  # (H, 2I)
    wd_b = p["wd_t"].astype(bf16)                                 # (I, H)
    return wq_b, wkv_b, wo_b, wgu_b, wd_b


def block_attn_layer(x, attn_mask, params, *, n_head, tq=None):
    B, S, H = x.shape
    Dh = H // n_head
    I = 4 * H
    if tq is None:
        tq = min(128, S)
    tq = min(tq, S)
    assert S % tq == 0 and (tq % 8 == 0 or tq == S), "bad query tile size"

    wq_b, wkv_b, wo_b, wgu_b, wd_b = _prepare_kernel_params(params, n_head)
    ln1, ln2 = params["ln1"], params["ln2"]

    kernel = functools.partial(_block_attn_kernel, n_head=n_head, head_dim=Dh,
                               hidden=H, inter=I, tq=tq, eps=1e-6)

    def const_spec(shape):
        nd = len(shape)
        # NOTE: on jax versions supporting it, pipeline_mode=pl.Buffered(1)
        # here would single-buffer these constant-index weight blocks.
        return pl.BlockSpec(tuple(shape), lambda b, q, _nd=nd: (0,) * _nd)

    in_specs = [
        pl.BlockSpec((1, S, H), lambda b, q: (b, 0, 0)),   # x: full sequence per batch
        pl.BlockSpec((1, tq, S), lambda b, q: (b, q, 0)),  # mask: query tile
        const_spec(wq_b.shape),                            # (H, H)     bf16
        const_spec(wkv_b.shape),                           # (H, 2H)    bf16
        const_spec(wo_b.shape),                            # (H, H)     bf16
        const_spec(ln1.shape),                             # (1, H)     f32
        const_spec(ln2.shape),                             # (1, H)     f32
        const_spec(wgu_b.shape),                           # (H, 2I)    bf16
        const_spec(wd_b.shape),                            # (I, H)     bf16
    ]
    out_spec = pl.BlockSpec((1, tq, H), lambda b, q: (b, q, 0))

    # Scoped-VMEM limit sized from the (double-buffered) weight footprint.
    w_bytes = 2 * (wq_b.size + wkv_b.size + wo_b.size + wgu_b.size + wd_b.size)
    vmem_limit = int(min(64 * 2**20, max(32 * 2**20, 2 * w_bytes + 16 * 2**20)))

    return pl.pallas_call(
        kernel,
        out_shape=jax.ShapeDtypeStruct((B, S, H), x.dtype),
        grid=(B, S // tq),
        in_specs=in_specs,
        out_specs=out_spec,
        scratch_shapes=[pltpu.VMEM((S, 2 * H), jnp.bfloat16)],   # cached K|V
        compiler_params=pltpu.CompilerParams(
            dimension_semantics=("parallel", "arbitrary"),
            vmem_limit_bytes=vmem_limit),
    )(x, attn_mask, wq_b, wkv_b, wo_b, ln1, ln2, wgu_b, wd_b)


def reference(x, mask, p, *, n_head):
    """Pure-JAX (f32) mirror of the PyTorch forward pass (for validation)."""
    B, S, H = x.shape
    Dh = H // n_head

    def rms(v, w):
        var = jnp.mean(v * v, axis=-1, keepdims=True)
        return v * jax.lax.rsqrt(var + 1e-6) * w

    h = rms(x, p["ln1"][0])
    q = (h @ p["wq_t"]).reshape(B, S, n_head, Dh).transpose(0, 2, 1, 3)
    k = (h @ p["wk_t"]).reshape(B, S, n_head, Dh).transpose(0, 2, 1, 3)
    v = (h @ p["wv_t"]).reshape(B, S, n_head, Dh).transpose(0, 2, 1, 3)
    s = jnp.einsum('bhqd,bhkd->bhqk', q, k) / math.sqrt(Dh)
    m = jnp.where(mask == 0.0, jnp.finfo(jnp.float32).min, mask)[:, None]
    s = s + m
    w = jax.nn.softmax(s, axis=-1)
    a = jnp.einsum('bhqk,bhkd->bhqd', w, v).transpose(0, 2, 1, 3).reshape(B, S, H)
    out1 = a @ p["wo_t"] + x
    h2 = rms(out1, p["ln2"][0])
    g = h2 @ p["wg_t"]
    u = h2 @ p["wu_t"]
    return out1 + (jax.nn.silu(g) * u) @ p["wd_t"]


def init_params(key, H, n_head):
    """Deterministic init matching nn.Linear default (uniform +- 1/sqrt(fan_in))."""
    I = 4 * H

    def linear_t(k, fan_in, fan_out):
        bound = 1.0 / math.sqrt(fan_in)
        w = jax.random.uniform(k, (fan_out, fan_in), jnp.float32, -bound, bound)
        return w.T  # store as (in, out) so forward is x @ W

    ks = jax.random.split(key, 7)
    return dict(
        wq_t=linear_t(ks[0], H, H),
        wk_t=linear_t(ks[1], H, H),
        wv_t=linear_t(ks[2], H, H),
        wo_t=linear_t(ks[3], H, H),
        wg_t=linear_t(ks[4], H, I),
        wu_t=linear_t(ks[5], H, I),
        wd_t=linear_t(ks[6], I, H),
        ln1=jnp.ones((1, H), jnp.float32),   # LlamaRMSNorm init = ones
        ln2=jnp.ones((1, H), jnp.float32),
    )


if __name__ == "__main__":
    B, S, H, n_head = 2, 16, 128, 4

    key = jax.random.PRNGKey(0)
    k_x, k_p = jax.random.split(key)

    x = jax.random.normal(k_x, (B, S, H), jnp.float32)
    # block / causal-style 0-1 mask (each row has at least one visible key)
    attn_mask = jnp.broadcast_to(jnp.tril(jnp.ones((S, S), jnp.float32)), (B, S, S))

    params = init_params(k_p, H, n_head)

    out = block_attn_layer(x, attn_mask, params, n_head=n_head, tq=8)
    out = jax.block_until_ready(out)

    ref = reference(x, attn_mask, params, n_head=n_head)
    assert out.shape == (B, S, H) and out.dtype == jnp.float32
    max_err = float(jnp.max(jnp.abs(out - ref)))
    # bf16 matmuls + approx reciprocal vs. pure-f32 reference -> loose tolerance
    assert jnp.allclose(out, ref, rtol=3e-2, atol=3e-2), f"max abs err = {max_err}"

    print("KERNEL_OK")
</pallas_src>

<mosaic_0001>
module attributes {stable_mosaic.version = 11 : i64} {
  func.func @_block_attn_kernel(%arg0: i32, %arg1: i32, %arg2: memref<1x16x128xf32, #tpu.memory_space<vmem>>, %arg3: memref<1x8x16xf32, #tpu.memory_space<vmem>>, %arg4: memref<128x128xbf16, #tpu.memory_space<vmem>>, %arg5: memref<128x256xbf16, #tpu.memory_space<vmem>>, %arg6: memref<128x128xbf16, #tpu.memory_space<vmem>>, %arg7: memref<1x128xf32, #tpu.memory_space<vmem>>, %arg8: memref<1x128xf32, #tpu.memory_space<vmem>>, %arg9: memref<128x1024xbf16, #tpu.memory_space<vmem>>, %arg10: memref<512x128xbf16, #tpu.memory_space<vmem>>, %arg11: memref<1x8x128xf32, #tpu.memory_space<vmem>>, %arg12: memref<16x256xbf16, #tpu.memory_space<vmem>>) attributes {dimension_semantics = [#tpu.dimension_semantics<parallel>, #tpu.dimension_semantics<arbitrary>], iteration_bounds = array<i64: 2, 2>, scalar_prefetch = 0 : i64, scratch_operands = 1 : i64, tpu.core_type = #tpu.core_type<tc>, window_params = [{transform_indices = @transform_0, window_bounds = array<i64: 1, 16, 128>}, {transform_indices = @transform_1, window_bounds = array<i64: 1, 8, 16>}, {pipeline_mode = #tpu.pipeline_mode<synchronous>, transform_indices = @transform_2, window_bounds = array<i64: 128, 128>}, {pipeline_mode = #tpu.pipeline_mode<synchronous>, transform_indices = @transform_3, window_bounds = array<i64: 128, 256>}, {pipeline_mode = #tpu.pipeline_mode<synchronous>, transform_indices = @transform_4, window_bounds = array<i64: 128, 128>}, {pipeline_mode = #tpu.pipeline_mode<synchronous>, transform_indices = @transform_5, window_bounds = array<i64: 1, 128>}, {pipeline_mode = #tpu.pipeline_mode<synchronous>, transform_indices = @transform_6, window_bounds = array<i64: 1, 128>}, {pipeline_mode = #tpu.pipeline_mode<synchronous>, transform_indices = @transform_7, window_bounds = array<i64: 128, 1024>}, {pipeline_mode = #tpu.pipeline_mode<synchronous>, transform_indices = @transform_8, window_bounds = array<i64: 512, 128>}, {transform_indices = @transform_9, window_bounds = array<i64: 1, 8, 128>}]} {
    %c0 = arith.constant 0 : index
    %c0_0 = arith.constant 0 : index
    %0 = vector.load %arg7[%c0, %c0_0] : memref<1x128xf32, #tpu.memory_space<vmem>>, vector<1x128xf32>
    %c0_i32 = arith.constant 0 : i32
    %1 = arith.cmpi eq, %arg1, %c0_i32 : i32
    %2 = arith.extui %1 : i1 to i32
    %c0_i32_1 = arith.constant 0 : i32
    %3 = arith.cmpi ne, %2, %c0_i32_1 : i32
    scf.if %3 {
      %c0_57 = arith.constant 0 : index
      %c0_58 = arith.constant 0 : index
      %c0_59 = arith.constant 0 : index
      %136 = vector.load %arg2[%c0_57, %c0_58, %c0_59] : memref<1x16x128xf32, #tpu.memory_space<vmem>>, vector<1x16x128xf32>
      %137 = vector.shape_cast %136 : vector<1x16x128xf32> to vector<16x128xf32>
      %138 = arith.mulf %137, %137 : vector<16x128xf32>
      %cst_60 = arith.constant dense<0.000000e+00> : vector<16xf32>
      %139 = vector.multi_reduction <add>, %138, %cst_60 [1] : vector<16x128xf32> to vector<16xf32>
      %140 = vector.shape_cast %139 : vector<16xf32> to vector<16x1xf32>
      %cst_61 = arith.constant 1.280000e+02 : f32
      %141 = vector.broadcast %cst_61 : f32 to vector<16x1xf32>
      %142 = arith.divf %140, %141 : vector<16x1xf32>
      %cst_62 = arith.constant 9.99999997E-7 : f32
      %143 = vector.broadcast %cst_62 : f32 to vector<16x1xf32>
      %144 = arith.addf %142, %143 : vector<16x1xf32>
      %145 = math.rsqrt %144 : vector<16x1xf32>
      %146 = vector.broadcast %145 : vector<16x1xf32> to vector<16x128xf32>
      %147 = arith.mulf %137, %146 : vector<16x128xf32>
      %148 = vector.broadcast %0 : vector<1x128xf32> to vector<16x128xf32>
      %149 = arith.mulf %147, %148 : vector<16x128xf32>
      %150 = arith.truncf %149 : vector<16x128xf32> to vector<16x128xbf16>
      %c0_63 = arith.constant 0 : index
      %c0_64 = arith.constant 0 : index
      %151 = vector.load %arg5[%c0_63, %c0_64] : memref<128x256xbf16, #tpu.memory_space<vmem>>, vector<128x256xbf16>
      %cst_65 = arith.constant dense<0.000000e+00> : vector<16x256xf32>
      %152 = tpu.matmul %150, %151, %cst_65 {dimension_numbers = #tpu.dot_dimension_numbers<[1], [0], [0], [1], [0, 0, 1, 1], [], []>} : vector<16x128xbf16>, vector<128x256xbf16>, vector<16x256xf32> -> vector<16x256xf32>
      %153 = arith.truncf %152 : vector<16x256xf32> to vector<16x256xbf16>
      %c0_66 = arith.constant 0 : index
      %c0_67 = arith.constant 0 : index
      %154 = vector.load %arg12[%c0_66, %c0_67] : memref<16x256xbf16, #tpu.memory_space<vmem>>, vector<16x256xbf16>
      tpu.vector_store %arg12[%c0_66, %c0_67], %153 {strides = array<i32>} : memref<16x256xbf16, #tpu.memory_space<vmem>>, vector<16x256xbf16>,
    } else {
    }
    %c8_i32 = arith.constant 8 : i32
    %4 = arith.muli %arg1, %c8_i32 : i32
    %5 = tpu.assume_multiple %4, 8 : i32
    %c0_2 = arith.constant 0 : index
    %6 = arith.index_cast %5 : i32 to index
    %c0_3 = arith.constant 0 : index
    %7 = vector.load %arg2[%c0_2, %6, %c0_3] : memref<1x16x128xf32, #tpu.memory_space<vmem>>, vector<1x8x128xf32>
    %8 = vector.shape_cast %7 : vector<1x8x128xf32> to vector<8x128xf32>
    %9 = arith.mulf %8, %8 : vector<8x128xf32>
    %cst = arith.constant dense<0.000000e+00> : vector<8xf32>
    %10 = vector.multi_reduction <add>, %9, %cst [1] : vector<8x128xf32> to vector<8xf32>
    %11 = vector.shape_cast %10 : vector<8xf32> to vector<8x1xf32>
    %cst_4 = arith.constant 1.280000e+02 : f32
    %12 = vector.broadcast %cst_4 : f32 to vector<8x1xf32>
    %13 = arith.divf %11, %12 : vector<8x1xf32>
    %cst_5 = arith.constant 9.99999997E-7 : f32
    %14 = vector.broadcast %cst_5 : f32 to vector<8x1xf32>
    %15 = arith.addf %13, %14 : vector<8x1xf32>
    %16 = math.rsqrt %15 : vector<8x1xf32>
    %17 = vector.broadcast %16 : vector<8x1xf32> to vector<8x128xf32>
    %18 = arith.mulf %8, %17 : vector<8x128xf32>
    %19 = vector.broadcast %0 : vector<1x128xf32> to vector<8x128xf32>
    %20 = arith.mulf %18, %19 : vector<8x128xf32>
    %21 = arith.truncf %20 : vector<8x128xf32> to vector<8x128xbf16>
    %c0_6 = arith.constant 0 : index
    %c0_7 = arith.constant 0 : index
    %22 = vector.load %arg4[%c0_6, %c0_7] : memref<128x128xbf16, #tpu.memory_space<vmem>>, vector<128x128xbf16>
    %cst_8 = arith.constant dense<0.000000e+00> : vector<8x128xf32>
    %23 = tpu.matmul %21, %22, %cst_8 {dimension_numbers = #tpu.dot_dimension_numbers<[1], [0], [0], [1], [0, 0, 1, 1], [], []>} : vector<8x128xbf16>, vector<128x128xbf16>, vector<8x128xf32> -> vector<8x128xf32>
    %24 = arith.truncf %23 : vector<8x128xf32> to vector<8x128xbf16>
    %c0_9 = arith.constant 0 : index
    %c0_10 = arith.constant 0 : index
    %c0_11 = arith.constant 0 : index
    %25 = vector.load %arg3[%c0_9, %c0_10, %c0_11] : memref<1x8x16xf32, #tpu.memory_space<vmem>>, vector<1x8x16xf32>
    %26 = vector.shape_cast %25 : vector<1x8x16xf32> to vector<8x16xf32>
    %cst_12 = arith.constant 0.000000e+00 : f32
    %27 = vector.broadcast %cst_12 : f32 to vector<8x16xf32>
    %28 = arith.cmpf oeq, %26, %27 : vector<8x16xf32>
    %cst_13 = arith.constant -3.40282347E+38 : f32
    %29 = vector.broadcast %cst_13 : f32 to vector<8x16xf32>
    %30 = arith.select %28, %29, %26 : vector<8x16xi1>, vector<8x16xf32>
    %31 = vector.extract_strided_slice %24 {offsets = [0, 0], sizes = [8, 32], strides = [1, 1]} : vector<8x128xbf16> to vector<8x32xbf16>
    %c0_14 = arith.constant 0 : index
    %c0_15 = arith.constant 0 : index
    %32 = vector.load %arg12[%c0_14, %c0_15] : memref<16x256xbf16, #tpu.memory_space<vmem>>, vector<16x32xbf16>
    %c0_16 = arith.constant 0 : index
    %c128 = arith.constant 128 : index
    %33 = vector.load %arg12[%c0_16, %c128] : memref<16x256xbf16, #tpu.memory_space<vmem>>, vector<16x32xbf16>
    %cst_17 = arith.constant dense<0.000000e+00> : vector<8x16xf32>
    %34 = tpu.matmul %31, %32, %cst_17 {dimension_numbers = #tpu.dot_dimension_numbers<[1], [1], [0], [0], [0, 0, 1, 0], [], []>} : vector<8x32xbf16>, vector<16x32xbf16>, vector<8x16xf32> -> vector<8x16xf32>
    %35 = arith.addf %34, %30 : vector<8x16xf32>
    %cst_18 = arith.constant dense<0xFF800000> : vector<8xf32>
    %36 = vector.multi_reduction <maximumf>, %35, %cst_18 [1] : vector<8x16xf32> to vector<8xf32>
    %37 = vector.shape_cast %36 : vector<8xf32> to vector<8x1xf32>
    %38 = vector.broadcast %37 : vector<8x1xf32> to vector<8x16xf32>
    %39 = arith.subf %35, %38 : vector<8x16xf32>
    %40 = math.exp %39 : vector<8x16xf32>
    %cst_19 = arith.constant dense<0.000000e+00> : vector<8xf32>
    %41 = vector.multi_reduction <add>, %40, %cst_19 [1] : vector<8x16xf32> to vector<8xf32>
    %42 = vector.shape_cast %41 : vector<8xf32> to vector<8x1xf32>
    %43 = tpu.reciprocal %42 {approx = true} : vector<8x1xf32> -> vector<8x1xf32>
    %44 = vector.broadcast %43 : vector<8x1xf32> to vector<8x16xf32>
    %45 = arith.mulf %40, %44 : vector<8x16xf32>
    %46 = arith.truncf %45 : vector<8x16xf32> to vector<8x16xbf16>
    %cst_20 = arith.constant dense<0.000000e+00> : vector<8x32xf32>
    %47 = tpu.matmul %46, %33, %cst_20 {dimension_numbers = #tpu.dot_dimension_numbers<[1], [0], [0], [1], [0, 0, 1, 1], [], []>} : vector<8x16xbf16>, vector<16x32xbf16>, vector<8x32xf32> -> vector<8x32xf32>
    %48 = vector.extract_strided_slice %24 {offsets = [0, 32], sizes = [8, 32], strides = [1, 1]} : vector<8x128xbf16> to vector<8x32xbf16>
    %c0_21 = arith.constant 0 : index
    %c32 = arith.constant 32 : index
    %49 = vector.load %arg12[%c0_21, %c32] : memref<16x256xbf16, #tpu.memory_space<vmem>>, vector<16x32xbf16>
    %c0_22 = arith.constant 0 : index
    %c160 = arith.constant 160 : index
    %50 = vector.load %arg12[%c0_22, %c160] : memref<16x256xbf16, #tpu.memory_space<vmem>>, vector<16x32xbf16>
    %cst_23 = arith.constant dense<0.000000e+00> : vector<8x16xf32>
    %51 = tpu.matmul %48, %49, %cst_23 {dimension_numbers = #tpu.dot_dimension_numbers<[1], [1], [0], [0], [0, 0, 1, 0], [], []>} : vector<8x32xbf16>, vector<16x32xbf16>, vector<8x16xf32> -> vector<8x16xf32>
    %52 = arith.addf %51, %30 : vector<8x16xf32>
    %cst_24 = arith.constant dense<0xFF800000> : vector<8xf32>
    %53 = vector.multi_reduction <maximumf>, %52, %cst_24 [1] : vector<8x16xf32> to vector<8xf32>
    %54 = vector.shape_cast %53 : vector<8xf32> to vector<8x1xf32>
    %55 = vector.broadcast %54 : vector<8x1xf32> to vector<8x16xf32>
    %56 = arith.subf %52, %55 : vector<8x16xf32>
    %57 = math.exp %56 : vector<8x16xf32>
    %cst_25 = arith.constant dense<0.000000e+00> : vector<8xf32>
    %58 = vector.multi_reduction <add>, %57, %cst_25 [1] : vector<8x16xf32> to vector<8xf32>
    %59 = vector.shape_cast %58 : vector<8xf32> to vector<8x1xf32>
    %60 = tpu.reciprocal %59 {approx = true} : vector<8x1xf32> -> vector<8x1xf32>
    %61 = vector.broadcast %60 : vector<8x1xf32> to vector<8x16xf32>
    %62 = arith.mulf %57, %61 : vector<8x16xf32>
    %63 = arith.truncf %62 : vector<8x16xf32> to vector<8x16xbf16>
    %cst_26 = arith.constant dense<0.000000e+00> : vector<8x32xf32>
    %64 = tpu.matmul %63, %50, %cst_26 {dimension_numbers = #tpu.dot_dimension_numbers<[1], [0], [0], [1], [0, 0, 1, 1], [], []>} : vector<8x16xbf16>, vector<16x32xbf16>, vector<8x32xf32> -> vector<8x32xf32>
    %65 = vector.extract_strided_slice %24 {offsets = [0, 64], sizes = [8, 32], strides = [1, 1]} : vector<8x128xbf16> to vector<8x32xbf16>
    %c0_27 = arith.constant 0 : index
    %c64 = arith.constant 64 : index
    %66 = vector.load %arg12[%c0_27, %c64] : memref<16x256xbf16, #tpu.memory_space<vmem>>, vector<16x32xbf16>
    %c0_28 = arith.constant 0 : index
    %c192 = arith.constant 192 : index
    %67 = vector.load %arg12[%c0_28, %c192] : memref<16x256xbf16, #tpu.memory_space<vmem>>, vector<16x32xbf16>
    %cst_29 = arith.constant dense<0.000000e+00> : vector<8x16xf32>
    %68 = tpu.matmul %65, %66, %cst_29 {dimension_numbers = #tpu.dot_dimension_numbers<[1], [1], [0], [0], [0, 0, 1, 0], [], []>} : vector<8x32xbf16>, vector<16x32xbf16>, vector<8x16xf32> -> vector<8x16xf32>
    %69 = arith.addf %68, %30 : vector<8x16xf32>
    %cst_30 = arith.constant dense<0xFF800000> : vector<8xf32>
    %70 = vector.multi_reduction <maximumf>, %69, %cst_30 [1] : vector<8x16xf32> to vector<8xf32>
    %71 = vector.shape_cast %70 : vector<8xf32> to vector<8x1xf32>
    %72 = vector.broadcast %71 : vector<8x1xf32> to vector<8x16xf32>
    %73 = arith.subf %69, %72 : vector<8x16xf32>
    %74 = math.exp %73 : vector<8x16xf32>
    %cst_31 = arith.constant dense<0.000000e+00> : vector<8xf32>
    %75 = vector.multi_reduction <add>, %74, %cst_31 [1] : vector<8x16xf32> to vector<8xf32>
    %76 = vector.shape_cast %75 : vector<8xf32> to vector<8x1xf32>
    %77 = tpu.reciprocal %76 {approx = true} : vector<8x1xf32> -> vector<8x1xf32>
    %78 = vector.broadcast %77 : vector<8x1xf32> to vector<8x16xf32>
    %79 = arith.mulf %74, %78 : vector<8x16xf32>
    %80 = arith.truncf %79 : vector<8x16xf32> to vector<8x16xbf16>
    %cst_32 = arith.constant dense<0.000000e+00> : vector<8x32xf32>
    %81 = tpu.matmul %80, %67, %cst_32 {dimension_numbers = #tpu.dot_dimension_numbers<[1], [0], [0], [1], [0, 0, 1, 1], [], []>} : vector<8x16xbf16>, vector<16x32xbf16>, vector<8x32xf32> -> vector<8x32xf32>
    %82 = vector.extract_strided_slice %24 {offsets = [0, 96], sizes = [8, 32], strides = [1, 1]} : vector<8x128xbf16> to vector<8x32xbf16>
    %c0_33 = arith.constant 0 : index
    %c96 = arith.constant 96 : index
    %83 = vector.load %arg12[%c0_33, %c96] : memref<16x256xbf16, #tpu.memory_space<vmem>>, vector<16x32xbf16>
    %c0_34 = arith.constant 0 : index
    %c224 = arith.constant 224 : index
    %84 = vector.load %arg12[%c0_34, %c224] : memref<16x256xbf16, #tpu.memory_space<vmem>>, vector<16x32xbf16>
    %cst_35 = arith.constant dense<0.000000e+00> : vector<8x16xf32>
    %85 = tpu.matmul %82, %83, %cst_35 {dimension_numbers = #tpu.dot_dimension_numbers<[1], [1], [0], [0], [0, 0, 1, 0], [], []>} : vector<8x32xbf16>, vector<16x32xbf16>, vector<8x16xf32> -> vector<8x16xf32>
    %86 = arith.addf %85, %30 : vector<8x16xf32>
    %cst_36 = arith.constant dense<0xFF800000> : vector<8xf32>
    %87 = vector.multi_reduction <maximumf>, %86, %cst_36 [1] : vector<8x16xf32> to vector<8xf32>
    %88 = vector.shape_cast %87 : vector<8xf32> to vector<8x1xf32>
    %89 = vector.broadcast %88 : vector<8x1xf32> to vector<8x16xf32>
    %90 = arith.subf %86, %89 : vector<8x16xf32>
    %91 = math.exp %90 : vector<8x16xf32>
    %cst_37 = arith.constant dense<0.000000e+00> : vector<8xf32>
    %92 = vector.multi_reduction <add>, %91, %cst_37 [1] : vector<8x16xf32> to vector<8xf32>
    %93 = vector.shape_cast %92 : vector<8xf32> to vector<8x1xf32>
    %94 = tpu.reciprocal %93 {approx = true} : vector<8x1xf32> -> vector<8x1xf32>
    %95 = vector.broadcast %94 : vector<8x1xf32> to vector<8x16xf32>
    %96 = arith.mulf %91, %95 : vector<8x16xf32>
    %97 = arith.truncf %96 : vector<8x16xf32> to vector<8x16xbf16>
    %cst_38 = arith.constant dense<0.000000e+00> : vector<8x32xf32>
    %98 = tpu.matmul %97, %84, %cst_38 {dimension_numbers = #tpu.dot_dimension_numbers<[1], [0], [0], [1], [0, 0, 1, 1], [], []>} : vector<8x16xbf16>, vector<16x32xbf16>, vector<8x32xf32> -> vector<8x32xf32>
    %99 = tpu.concatenate %47, %64, %81, %98 in 1 : vector<8x32xf32>, vector<8x32xf32>, vector<8x32xf32>, vector<8x32xf32> -> vector<8x128xf32>
    %100 = arith.truncf %99 : vector<8x128xf32> to vector<8x128xbf16>
    %c0_39 = arith.constant 0 : index
    %c0_40 = arith.constant 0 : index
    %101 = vector.load %arg6[%c0_39, %c0_40] : memref<128x128xbf16, #tpu.memory_space<vmem>>, vector<128x128xbf16>
    %cst_41 = arith.constant dense<0.000000e+00> : vector<8x128xf32>
    %102 = tpu.matmul %100, %101, %cst_41 {dimension_numbers = #tpu.dot_dimension_numbers<[1], [0], [0], [1], [0, 0, 1, 1], [], []>} : vector<8x128xbf16>, vector<128x128xbf16>, vector<8x128xf32> -> vector<8x128xf32>
    %103 = arith.addf %102, %8 : vector<8x128xf32>
    %c0_42 = arith.constant 0 : index
    %c0_43 = arith.constant 0 : index
    %104 = vector.load %arg8[%c0_42, %c0_43] : memref<1x128xf32, #tpu.memory_space<vmem>>, vector<1x128xf32>
    %105 = arith.mulf %103, %103 : vector<8x128xf32>
    %cst_44 = arith.constant dense<0.000000e+00> : vector<8xf32>
    %106 = vector.multi_reduction <add>, %105, %cst_44 [1] : vector<8x128xf32> to vector<8xf32>
    %107 = vector.shape_cast %106 : vector<8xf32> to vector<8x1xf32>
    %cst_45 = arith.constant 1.280000e+02 : f32
    %108 = vector.broadcast %cst_45 : f32 to vector<8x1xf32>
    %109 = arith.divf %107, %108 : vector<8x1xf32>
    %cst_46 = arith.constant 9.99999997E-7 : f32
    %110 = vector.broadcast %cst_46 : f32 to vector<8x1xf32>
    %111 = arith.addf %109, %110 : vector<8x1xf32>
    %112 = math.rsqrt %111 : vector<8x1xf32>
    %113 = vector.broadcast %112 : vector<8x1xf32> to vector<8x128xf32>
    %114 = arith.mulf %103, %113 : vector<8x128xf32>
    %115 = vector.broadcast %104 : vector<1x128xf32> to vector<8x128xf32>
    %116 = arith.mulf %114, %115 : vector<8x128xf32>
    %117 = arith.truncf %116 : vector<8x128xf32> to vector<8x128xbf16>
    %c0_47 = arith.constant 0 : index
    %c0_48 = arith.constant 0 : index
    %118 = vector.load %arg9[%c0_47, %c0_48] : memref<128x1024xbf16, #tpu.memory_space<vmem>>, vector<128x1024xbf16>
    %cst_49 = arith.constant dense<0.000000e+00> : vector<8x1024xf32>
    %119 = tpu.matmul %117, %118, %cst_49 {dimension_numbers = #tpu.dot_dimension_numbers<[1], [0], [0], [1], [0, 0, 1, 1], [], []>} : vector<8x128xbf16>, vector<128x1024xbf16>, vector<8x1024xf32> -> vector<8x1024xf32>
    %120 = vector.extract_strided_slice %119 {offsets = [0, 0], sizes = [8, 512], strides = [1, 1]} : vector<8x1024xf32> to vector<8x512xf32>
    %121 = vector.extract_strided_slice %119 {offsets = [0, 512], sizes = [8, 512], strides = [1, 1]} : vector<8x1024xf32> to vector<8x512xf32>
    %122 = arith.negf %120 : vector<8x512xf32>
    %123 = math.exp %122 : vector<8x512xf32>
    %cst_50 = arith.constant 1.000000e+00 : f32
    %124 = vector.broadcast %cst_50 : f32 to vector<8x512xf32>
    %125 = arith.addf %124, %123 : vector<8x512xf32>
    %126 = arith.divf %124, %125 : vector<8x512xf32>
    %127 = arith.mulf %120, %126 : vector<8x512xf32>
    %128 = arith.mulf %127, %121 : vector<8x512xf32>
    %129 = arith.truncf %128 : vector<8x512xf32> to vector<8x512xbf16>
    %c0_51 = arith.constant 0 : index
    %c0_52 = arith.constant 0 : index
    %130 = vector.load %arg10[%c0_51, %c0_52] : memref<512x128xbf16, #tpu.memory_space<vmem>>, vector<512x128xbf16>
    %cst_53 = arith.constant dense<0.000000e+00> : vector<8x128xf32>
    %131 = tpu.matmul %129, %130, %cst_53 {dimension_numbers = #tpu.dot_dimension_numbers<[1], [0], [0], [1], [0, 0, 1, 1], [], []>} : vector<8x512xbf16>, vector<512x128xbf16>, vector<8x128xf32> -> vector<8x128xf32>
    %132 = arith.addf %103, %131 : vector<8x128xf32>
    %c0_54 = arith.constant 0 : index
    %c0_55 = arith.constant 0 : index
    %c0_56 = arith.constant 0 : index
    %133 = vector.load %arg11[%c0_54, %c0_55, %c0_56] : memref<1x8x128xf32, #tpu.memory_space<vmem>>, vector<1x8x128xf32>
    %134 = vector.shape_cast %133 : vector<1x8x128xf32> to vector<8x128xf32>
    %135 = vector.shape_cast %132 : vector<8x128xf32> to vector<1x8x128xf32>
    tpu.vector_store %arg11[%c0_54, %c0_55, %c0_56], %135 {strides = array<i32>} : memref<1x8x128xf32, #tpu.memory_space<vmem>>, vector<1x8x128xf32>,
    return
  }
  func.func @transform_0(%arg0: i32, %arg1: i32) -> (i32, i32, i32) {
    %c0_i32 = arith.constant 0 : i32
    %c0_i32_0 = arith.constant 0 : i32
    %c0_i32_1 = arith.constant 0 : i32
    return %arg0, %c0_i32, %c0_i32_0 : i32, i32, i32
  }
  func.func @transform_1(%arg0: i32, %arg1: i32) -> (i32, i32, i32) {
    %c0_i32 = arith.constant 0 : i32
    %c0_i32_0 = arith.constant 0 : i32
    return %arg0, %arg1, %c0_i32 : i32, i32, i32
  }
  func.func @transform_2(%arg0: i32, %arg1: i32) -> (i32, i32) {
    %c0_i32 = arith.constant 0 : i32
    %c0_i32_0 = arith.constant 0 : i32
    %c0_i32_1 = arith.constant 0 : i32
    return %c0_i32, %c0_i32_0 : i32, i32
  }
  func.func @transform_3(%arg0: i32, %arg1: i32) -> (i32, i32) {
    %c0_i32 = arith.constant 0 : i32
    %c0_i32_0 = arith.constant 0 : i32
    %c0_i32_1 = arith.constant 0 : i32
    return %c0_i32, %c0_i32_0 : i32, i32
  }
  func.func @transform_4(%arg0: i32, %arg1: i32) -> (i32, i32) {
    %c0_i32 = arith.constant 0 : i32
    %c0_i32_0 = arith.constant 0 : i32
    %c0_i32_1 = arith.constant 0 : i32
    return %c0_i32, %c0_i32_0 : i32, i32
  }
  func.func @transform_5(%arg0: i32, %arg1: i32) -> (i32, i32) {
    %c0_i32 = arith.constant 0 : i32
    %c0_i32_0 = arith.constant 0 : i32
    %c0_i32_1 = arith.constant 0 : i32
    return %c0_i32, %c0_i32_0 : i32, i32
  }
  func.func @transform_6(%arg0: i32, %arg1: i32) -> (i32, i32) {
    %c0_i32 = arith.constant 0 : i32
    %c0_i32_0 = arith.constant 0 : i32
    %c0_i32_1 = arith.constant 0 : i32
    return %c0_i32, %c0_i32_0 : i32, i32
  }
  func.func @transform_7(%arg0: i32, %arg1: i32) -> (i32, i32) {
    %c0_i32 = arith.constant 0 : i32
    %c0_i32_0 = arith.constant 0 : i32
    %c0_i32_1 = arith.constant 0 : i32
    return %c0_i32, %c0_i32_0 : i32, i32
  }
  func.func @transform_8(%arg0: i32, %arg1: i32) -> (i32, i32) {
    %c0_i32 = arith.constant 0 : i32
    %c0_i32_0 = arith.constant 0 : i32
    %c0_i32_1 = arith.constant 0 : i32
    return %c0_i32, %c0_i32_0 : i32, i32
  }
  func.func @transform_9(%arg0: i32, %arg1: i32) -> (i32, i32, i32) {
    %c0_i32 = arith.constant 0 : i32
    %c0_i32_0 = arith.constant 0 : i32
    return %arg0, %arg1, %c0_i32 : i32, i32, i32
  }
}

</mosaic_0001>

<llo_original>
// kernel: tpu_custom_call.1
$region0: #{tpu_custom_call.1}
  #allocation0 [shape = 'u32[]', space=smem, size = 0x4, offset = 0x4, fixed_abs, tag = 'smem constant byte address 0x4 - core index']
  #allocation1 [shape = 'u32[144,128]{1,0:T(1,128)}', space=vmem, size = 0x12000, scoped, tag = 'internal scratch']
  #allocation2 [shape = 'bf16[16,256]{1,0:T(16,128)(2,1)}', space=vmem, size = 0x2000, scoped, tag = 'scratch operand']
  %s0 = inlined_call_operand.hbm [shape: f32[2,16,128], index: 0, kind: input, shape index: {}]
  %s1 = inlined_call_operand.hbm [shape: f32[2,16,16], index: 1, kind: input, shape index: {}]
  %s2 = inlined_call_operand.hbm [shape: bf16[128,128], index: 2, kind: input, shape index: {}]
  %s3 = inlined_call_operand.hbm [shape: bf16[128,256], index: 3, kind: input, shape index: {}]
  %s4 = inlined_call_operand.hbm [shape: bf16[128,128], index: 4, kind: input, shape index: {}]
  %s5 = inlined_call_operand.vmem [shape: f32[1,128], index: 5, kind: input, shape index: {}]
  %s6 = inlined_call_operand.vmem [shape: f32[1,128], index: 6, kind: input, shape index: {}]
  %s7 = inlined_call_operand.hbm [shape: bf16[128,1024], index: 7, kind: input, shape index: {}]
  %s8 = inlined_call_operand.hbm [shape: bf16[512,128], index: 8, kind: input, shape index: {}]
  %s9 = inlined_call_operand.hbm [shape: f32[2,16,128], index: 9, kind: output, shape index: {}]
  %s10 = sld [smem:[#allocation0]]
  $region101: #{tpu_custom_call.1} parent=0
    _
  %s12 = ssub.s32 1, %s10
  %s13 = scalar_select 0, %s12, %s10
  $region1: #{tpu_custom_call.1} parent=0
    #allocation3 [shape = 'u8[16384]{0}', space=vmem, size = 0x4000, scoped, tag = 'input window, operand 0']
    #allocation4 [shape = 's32[2]{0}', space=sflag, size = 0x8, scoped, tag = 'scoped memory for tpu_custom_call.1']
    #allocation5 [shape = 's32[2]{0}', space=sflag, size = 0x8, scoped, tag = 'scoped memory for tpu_custom_call.1']
    #allocation6 [shape = 'u8[8192]{0}', space=vmem, size = 0x2000, scoped, tag = 'input window, operand 1']
    #allocation7 [shape = 's32[2]{0}', space=sflag, size = 0x8, scoped, tag = 'scoped memory for tpu_custom_call.1']
    #allocation8 [shape = 'u8[32768]{0}', space=vmem, size = 0x8000, scoped, tag = 'input window, operand 2, single buffered']
    #allocation9 [shape = 'u8[65536]{0}', space=vmem, size = 0x10000, scoped, tag = 'input window, operand 3, single buffered']
    #allocation10 [shape = 's32[1]{0}', space=sflag, size = 0x4, scoped, tag = 'scoped memory for tpu_custom_call.1']
    #allocation11 [shape = 'u8[32768]{0}', space=vmem, size = 0x8000, scoped, tag = 'input window, operand 4, single buffered']
    #allocation12 [shape = 'u8[262144]{0}', space=vmem, size = 0x40000, scoped, tag = 'input window, operand 7, single buffered']
    #allocation13 [shape = 's32[1]{0}', space=sflag, size = 0x4, scoped, tag = 'scoped memory for tpu_custom_call.1']
    #allocation14 [shape = 'u8[131072]{0}', space=vmem, size = 0x20000, scoped, tag = 'input window, operand 8, single buffered']
    #allocation15 [shape = 'u8[8192]{0}', space=vmem, size = 0x2000, scoped, tag = 'output window, operand 0']
    %14 = vsyncpa [#allocation4], 0
    %s15 = scalar_lea.sflag [#allocation4], 1
    %16 = vsyncpa %s15, 0
    %17 = vsyncpa [#allocation7], 0
    %s18 = scalar_lea.sflag [#allocation7], 1
    %19 = vsyncpa %s18, 0
    %20 = vsyncpa [#allocation10], 0
    %21 = vsyncpa [#allocation13], 0
    %22 = vsyncpa [#allocation5], 0
    %s23 = scalar_lea.sflag [#allocation5], 1
    %24 = vsyncpa %s23, 0
    loop: start=0, step=1, limit=6
    $region2: #{tpu_custom_call.1} parent=1 // loop_pre_header
      _
    $region3: #{tpu_custom_call.1} parent=1 // loop_header
      %s26 = sphi 0, %s30
      %p27 = scmp.ge.s32.totalorder %s26, 6
      %s33 = sphi 0, %s45
      %s34 = sphi 0, %s41
      %s35 = sphi 0, %s33
      %s36 = sphi 0, %s34
      %s37 = sphi 0, %s35
      %s38 = sphi 0, %s36
      %s48 = sphi 0, %s50
      %s51 = sphi 0, %s48
      %s52 = sphi 0, %s51
      %s68 = sphi 0, %s52
      %s76 = sphi 0, %s78
      %s79 = sphi 0, %s76
      %s80 = sphi 0, %s79
      %s96 = sphi 0, %s80
      %s100 = sphi 0, %s100
      %s102 = sphi 0, %s100
      %s103 = sphi 0, %s102
      %s117 = sphi 0, %s103
      %s121 = sphi 0, %s121
      %s123 = sphi 0, %s121
      %s124 = sphi 0, %s123
      %s138 = sphi 0, %s124
      %s142 = sphi 0, %s142
      %s144 = sphi 0, %s142
      %s145 = sphi 0, %s144
      %s159 = sphi 0, %s145
      %s163 = sphi 0, %s163
      %s165 = sphi 0, %s163
      %s166 = sphi 0, %s165
      %s180 = sphi 0, %s166
      %s184 = sphi 0, %s184
      %s186 = sphi 0, %s184
      %s187 = sphi 0, %s186
      %s201 = sphi 0, %s187
      %s205 = sphi 0, %s205
      %s207 = sphi 0, %s205
      %s208 = sphi 0, %s207
      %s222 = sphi 0, %s208
      %s226 = sphi 0, %s226
      %s228 = sphi 0, %s226
      %s229 = sphi 0, %s228
      %s243 = sphi 0, %s229
      %s251 = sphi 0, %s253
      %s254 = sphi 0, %s251
      %s255 = sphi 0, %s254
      %s271 = sphi 0, %s255
    $region4: #{tpu_custom_call.1} parent=1 // loop_header_branch
      %29 = sbr.rel (%p27) target = $region8
    $region5: #{tpu_custom_call.1} parent=1 // loop_body
      %s31 = ssub.s32 %s26, 1
      %s32 = ssub.s32 %s26, 2
      %s39 = sadd.s32 1, %s34
      %p40 = scmp.ge.s32.totalorder %s39, 2
      %s41 = scalar_select %p40, 0, %s39
      %s42 = sadd.s32 1, %s33
      %s43 = scalar_select %p40, %s42, %s33
      %p44 = scmp.ge.s32.totalorder %s43, 2
      %s45 = scalar_select %p44, 0, %s43
      %s46 = ssub.s32 %s33, %s45
      %p47 = scmp.eq.s32.totalorder %s46, 0
      %s49 = sadd.s32 %s48, 1
      %s50 = scalar_select %p47, %s48, %s49
      %p53 = pneg %p47
      %p54 = scmp.eq.s32.totalorder %s26, 3
      %p55 = por %p53, %p54
      %p56 = scmp.ne.s32.totalorder %s48, %s51
      %p57 = scmp.eq.s32.totalorder %s26, 0
      %p58 = por %p56, %p57
      %p59 = scmp.ne.s32.totalorder %s48, %s51
      %p60 = scmp.eq.s32.totalorder %s31, 3
      %p61 = por %p59, %p60
      %p62 = scmp.ne.s32.totalorder %s51, %s52
      %p63 = scmp.eq.s32.totalorder %s31, 0
      %p64 = por %p62, %p63
      %p65 = scmp.ne.s32.totalorder %s51, %s52
      %p66 = scmp.eq.s32.totalorder %s32, 3
      %p67 = por %p65, %p66
      %p69 = scmp.ne.s32.totalorder %s52, %s68
      %p70 = scmp.eq.s32.totalorder %s32, 0
      %p71 = por %p69, %p70
      %s72 = ssub.s32 %s33, %s45
      %s73 = ssub.s32 %s34, %s41
      %s74 = sor.u32 %s72, %s73
      %p75 = scmp.eq.s32.totalorder %s74, 0
      %s77 = sadd.s32 %s76, 1
      %s78 = scalar_select %p75, %s76, %s77
      %p81 = pneg %p75
      %p82 = scmp.eq.s32.totalorder %s26, 3
      %p83 = por %p81, %p82
      %p84 = scmp.ne.s32.totalorder %s76, %s79
      %p85 = scmp.eq.s32.totalorder %s26, 0
      %p86 = por %p84, %p85
      %p87 = scmp.ne.s32.totalorder %s76, %s79
      %p88 = scmp.eq.s32.totalorder %s31, 3
      %p89 = por %p87, %p88
      %p90 = scmp.ne.s32.totalorder %s79, %s80
      %p91 = scmp.eq.s32.totalorder %s31, 0
      %p92 = por %p90, %p91
      %p93 = scmp.ne.s32.totalorder %s79, %s80
      %p94 = scmp.eq.s32.totalorder %s32, 3
      %p95 = por %p93, %p94
      %p97 = scmp.ne.s32.totalorder %s80, %s96
      %p98 = scmp.eq.s32.totalorder %s32, 0
      %p99 = por %p97, %p98
      %s101 = sadd.s32 %s100, 1
      %p104 = scmp.eq.s32.totalorder %s26, 3
      %p105 = scmp.ne.s32.totalorder %s100, %s102
      %p106 = scmp.eq.s32.totalorder %s26, 0
      %p107 = por %p105, %p106
      %p108 = scmp.ne.s32.totalorder %s100, %s102
      %p109 = scmp.eq.s32.totalorder %s31, 3
      %p110 = por %p108, %p109
      %p111 = scmp.ne.s32.totalorder %s102, %s103
      %p112 = scmp.eq.s32.totalorder %s31, 0
      %p113 = por %p111, %p112
      %p114 = scmp.ne.s32.totalorder %s102, %s103
      %p115 = scmp.eq.s32.totalorder %s32, 3
      %p116 = por %p114, %p115
      %p118 = scmp.ne.s32.totalorder %s103, %s117
      %p119 = scmp.eq.s32.totalorder %s32, 0
      %p120 = por %p118, %p119
      %s122 = sadd.s32 %s121, 1
      %p125 = scmp.eq.s32.totalorder %s26, 3
      %p126 = scmp.ne.s32.totalorder %s121, %s123
      %p127 = scmp.eq.s32.totalorder %s26, 0
      %p128 = por %p126, %p127
      %p129 = scmp.ne.s32.totalorder %s121, %s123
      %p130 = scmp.eq.s32.totalorder %s31, 3
      %p131 = por %p129, %p130
      %p132 = scmp.ne.s32.totalorder %s123, %s124
      %p133 = scmp.eq.s32.totalorder %s31, 0
      %p134 = por %p132, %p133
      %p135 = scmp.ne.s32.totalorder %s123, %s124
      %p136 = scmp.eq.s32.totalorder %s32, 3
      %p137 = por %p135, %p136
      %p139 = scmp.ne.s32.totalorder %s124, %s138
      %p140 = scmp.eq.s32.totalorder %s32, 0
      %p141 = por %p139, %p140
      %s143 = sadd.s32 %s142, 1
      %p146 = scmp.eq.s32.totalorder %s26, 3
      %p147 = scmp.ne.s32.totalorder %s142, %s144
      %p148 = scmp.eq.s32.totalorder %s26, 0
      %p149 = por %p147, %p148
      %p150 = scmp.ne.s32.totalorder %s142, %s144
      %p151 = scmp.eq.s32.totalorder %s31, 3
      %p152 = por %p150, %p151
      %p153 = scmp.ne.s32.totalorder %s144, %s145
      %p154 = scmp.eq.s32.totalorder %s31, 0
      %p155 = por %p153, %p154
      %p156 = scmp.ne.s32.totalorder %s144, %s145
      %p157 = scmp.eq.s32.totalorder %s32, 3
      %p158 = por %p156, %p157
      %p160 = scmp.ne.s32.totalorder %s145, %s159
      %p161 = scmp.eq.s32.totalorder %s32, 0
      %p162 = por %p160, %p161
      %s164 = sadd.s32 %s163, 1
      %p167 = scmp.eq.s32.totalorder %s26, 3
      %p168 = scmp.ne.s32.totalorder %s163, %s165
      %p169 = scmp.eq.s32.totalorder %s26, 0
      %p170 = por %p168, %p169
      %p171 = scmp.ne.s32.totalorder %s163, %s165
      %p172 = scmp.eq.s32.totalorder %s31, 3
      %p173 = por %p171, %p172
      %p174 = scmp.ne.s32.totalorder %s165, %s166
      %p175 = scmp.eq.s32.totalorder %s31, 0
      %p176 = por %p174, %p175
      %p177 = scmp.ne.s32.totalorder %s165, %s166
      %p178 = scmp.eq.s32.totalorder %s32, 3
      %p179 = por %p177, %p178
      %p181 = scmp.ne.s32.totalorder %s166, %s180
      %p182 = scmp.eq.s32.totalorder %s32, 0
      %p183 = por %p181, %p182
      %s185 = sadd.s32 %s184, 1
      %p188 = scmp.eq.s32.totalorder %s26, 3
      %p189 = scmp.ne.s32.totalorder %s184, %s186
      %p190 = scmp.eq.s32.totalorder %s26, 0
      %p191 = por %p189, %p190
      %p192 = scmp.ne.s32.totalorder %s184, %s186
      %p193 = scmp.eq.s32.totalorder %s31, 3
      %p194 = por %p192, %p193
      %p195 = scmp.ne.s32.totalorder %s186, %s187
      %p196 = scmp.eq.s32.totalorder %s31, 0
      %p197 = por %p195, %p196
      %p198 = scmp.ne.s32.totalorder %s186, %s187
      %p199 = scmp.eq.s32.totalorder %s32, 3
      %p200 = por %p198, %p199
      %p202 = scmp.ne.s32.totalorder %s187, %s201
      %p203 = scmp.eq.s32.totalorder %s32, 0
      %p204 = por %p202, %p203
      %s206 = sadd.s32 %s205, 1
      %p209 = scmp.eq.s32.totalorder %s26, 3
      %p210 = scmp.ne.s32.totalorder %s205, %s207
      %p211 = scmp.eq.s32.totalorder %s26, 0
      %p212 = por %p210, %p211
      %p213 = scmp.ne.s32.totalorder %s205, %s207
      %p214 = scmp.eq.s32.totalorder %s31, 3
      %p215 = por %p213, %p214
      %p216 = scmp.ne.s32.totalorder %s207, %s208
      %p217 = scmp.eq.s32.totalorder %s31, 0
      %p218 = por %p216, %p217
      %p219 = scmp.ne.s32.totalorder %s207, %s208
      %p220 = scmp.eq.s32.totalorder %s32, 3
      %p221 = por %p219, %p220
      %p223 = scmp.ne.s32.totalorder %s208, %s222
      %p224 = scmp.eq.s32.totalorder %s32, 0
      %p225 = por %p223, %p224
      %s227 = sadd.s32 %s226, 1
      %p230 = scmp.eq.s32.totalorder %s26, 3
      %p231 = scmp.ne.s32.totalorder %s226, %s228
      %p232 = scmp.eq.s32.totalorder %s26, 0
      %p233 = por %p231, %p232
      %p234 = scmp.ne.s32.totalorder %s226, %s228
      %p235 = scmp.eq.s32.totalorder %s31, 3
      %p236 = por %p234, %p235
      %p237 = scmp.ne.s32.totalorder %s228, %s229
      %p238 = scmp.eq.s32.totalorder %s31, 0
      %p239 = por %p237, %p238
      %p240 = scmp.ne.s32.totalorder %s228, %s229
      %p241 = scmp.eq.s32.totalorder %s32, 3
      %p242 = por %p240, %p241
      %p244 = scmp.ne.s32.totalorder %s229, %s243
      %p245 = scmp.eq.s32.totalorder %s32, 0
      %p246 = por %p244, %p245
      %s247 = ssub.s32 %s33, %s45
      %s248 = ssub.s32 %s34, %s41
      %s249 = sor.u32 %s247, %s248
      %p250 = scmp.eq.s32.totalorder %s249, 0
      %s252 = sadd.s32 %s251, 1
      %s253 = scalar_select %p250, %s251, %s252
      %p256 = pneg %p250
      %p257 = scmp.eq.s32.totalorder %s26, 3
      %p258 = por %p256, %p257
      %p259 = scmp.ne.s32.totalorder %s251, %s254
      %p260 = scmp.eq.s32.totalorder %s26, 0
      %p261 = por %p259, %p260
      %p262 = scmp.ne.s32.totalorder %s251, %s254
      %p263 = scmp.eq.s32.totalorder %s31, 3
      %p264 = por %p262, %p263
      %p265 = scmp.ne.s32.totalorder %s254, %s255
      %p266 = scmp.eq.s32.totalorder %s31, 0
      %p267 = por %p265, %p266
      %p268 = scmp.ne.s32.totalorder %s254, %s255
      %p269 = scmp.eq.s32.totalorder %s32, 3
      %p270 = por %p268, %p269
      %p272 = scmp.ne.s32.totalorder %s255, %s271
      %p273 = scmp.eq.s32.totalorder %s32, 0
      %p274 = por %p272, %p273
      %p275 = scmp.le.s32.totalorder 1, %s26
      %p276 = scmp.lt.s32.totalorder %s26, 5
      %p277 = pnand %p275, %p276
      %p278 = pneg %p277
      // Predicated region
      $region9: #{tpu_custom_call.1} parent=5 // pred_check
        _
      $region10: #{tpu_custom_call.1} parent=5 // pred_check_branch
        %280 = sbr.rel (%p277) target = $region12
      $region11: #{tpu_custom_call.1} parent=5 // pred_region
        %s281 = ssub.s32 %s26, 1
        // Predicated region
        $region13: #{tpu_custom_call.1} parent=11 // pred_check
          %p282 = pneg %p113
        $region14: #{tpu_custom_call.1} parent=11 // pred_check_branch
          %284 = sbr.rel (%p282) target = $region16
        $region15: #{tpu_custom_call.1} parent=11 // pred_region
          %s286 = ssub.s32 1024, 1024
          %287 = vsyncadd [#allocation7], %s286
          %s288 = sshll.u32 [#allocation8], 4
          %s289 = int_to_ptr.vmem [resolvable:$true] %s288
          %294 = dma.hbm_to_vmem [thread:$0]  %s2, 1024, %s289, [#allocation7], 64, 64, 4
        $region16: #{tpu_custom_call.1} parent=11 // pred_fallthru
          _
        // Predicated region
        $region17: #{tpu_custom_call.1} parent=11 // pred_check
          %p295 = pneg %p134
        $region18: #{tpu_custom_call.1} parent=11 // pred_check_branch
          %297 = sbr.rel (%p295) target = $region20
        $region19: #{tpu_custom_call.1} parent=11 // pred_region
          %s299 = ssub.s32 2048, 2048
          %300 = vsyncadd [#allocation10], %s299
          %s301 = sshll.u32 [#allocation9], 4
          %s302 = int_to_ptr.vmem [resolvable:$true] %s301
          %307 = dma.hbm_to_vmem [thread:$0]  %s3, 2048, %s302, [#allocation10], 128, 128, 8
        $region20: #{tpu_custom_call.1} parent=11 // pred_fallthru
          _
        // Predicated region
        $region21: #{tpu_custom_call.1} parent=11 // pred_check
          %p308 = pneg %p155
        $region22: #{tpu_custom_call.1} parent=11 // pred_check_branch
          %310 = sbr.rel (%p308) target = $region24
        $region23: #{tpu_custom_call.1} parent=11 // pred_region
          %s312 = ssub.s32 1024, 1024
          %313 = vsyncadd [#allocation10], %s312
          %s314 = sshll.u32 [#allocation11], 4
          %s315 = int_to_ptr.vmem [resolvable:$true] %s314
          %320 = dma.hbm_to_vmem [thread:$0]  %s4, 1024, %s315, [#allocation10], 64, 64, 4
        $region24: #{tpu_custom_call.1} parent=11 // pred_fallthru
          _
        // Predicated region
        $region25: #{tpu_custom_call.1} parent=11 // pred_check
          %p321 = pneg %p176
        $region26: #{tpu_custom_call.1} parent=11 // pred_check_branch
          %323 = sbr.rel (%p321) target = $region28
        $region27: #{tpu_custom_call.1} parent=11 // pred_region
          _
        $region28: #{tpu_custom_call.1} parent=11 // pred_fallthru
          _
        // Predicated region
        $region29: #{tpu_custom_call.1} parent=11 // pred_check
          %p324 = pneg %p197
        $region30: #{tpu_custom_call.1} parent=11 // pred_check_branch
          %326 = sbr.rel (%p324) target = $region32
        $region31: #{tpu_custom_call.1} parent=11 // pred_region
          _
        $region32: #{tpu_custom_call.1} parent=11 // pred_fallthru
          _
        // Predicated region
        $region33: #{tpu_custom_call.1} parent=11 // pred_check
          %p327 = pneg %p218
        $region34: #{tpu_custom_call.1} parent=11 // pred_check_branch
          %329 = sbr.rel (%p327) target = $region36
        $region35: #{tpu_custom_call.1} parent=11 // pred_region
          %s331 = ssub.s32 8192, 8192
          %332 = vsyncadd [#allocation13], %s331
          %s333 = sshll.u32 [#allocation12], 4
          %s334 = int_to_ptr.vmem [resolvable:$true] %s333
          %339 = dma.hbm_to_vmem [thread:$0]  %s7, 8192, %s334, [#allocation13], 512, 512, 32
        $region36: #{tpu_custom_call.1} parent=11 // pred_fallthru
          _
        // Predicated region
        $region37: #{tpu_custom_call.1} parent=11 // pred_check
          %p340 = pneg %p239
        $region38: #{tpu_custom_call.1} parent=11 // pred_check_branch
          %342 = sbr.rel (%p340) target = $region40
        $region39: #{tpu_custom_call.1} parent=11 // pred_region
          %s344 = ssub.s32 4096, 4096
          %345 = vsyncadd [#allocation13], %s344
          %s346 = sshll.u32 [#allocation14], 4
          %s347 = int_to_ptr.vmem [resolvable:$true] %s346
          %352 = dma.hbm_to_vmem [thread:$0]  %s8, 4096, %s347, [#allocation13], 64, 64, 4
        $region40: #{tpu_custom_call.1} parent=11 // pred_fallthru
          _
      $region12: #{tpu_custom_call.1} parent=5 // pred_fallthru
        _
      %p353 = scmp.lt.s32.totalorder %s26, 4
      // Predicated region
      $region41: #{tpu_custom_call.1} parent=5 // pred_check
        %p354 = pneg %p353
      $region42: #{tpu_custom_call.1} parent=5 // pred_check_branch
        %356 = sbr.rel (%p354) target = $region44
      $region43: #{tpu_custom_call.1} parent=5 // pred_region
        // Predicated region
        $region45: #{tpu_custom_call.1} parent=43 // pred_check
          %p357 = pneg %p58
        $region46: #{tpu_custom_call.1} parent=43 // pred_check_branch
          %359 = sbr.rel (%p357) target = $region48
        $region47: #{tpu_custom_call.1} parent=43 // pred_region
          %s360 = sand.u32 %s48, 1
          %s361 = scalar_lea.sflag [#allocation4], %s360
          %s362 = sand.u32 %s48, 1
          %s363 = smul.addr %s362, 16
          %s364 = scalar_lea.vmem [#allocation3], %s363
          %s366 = ssub.s32 256, 256
          %367 = vsyncadd %s361, %s366
          %s368 = smul.addr %s33, 2
          %s369 = smul.addr %s368, 128
          %s370 = scalar_lea.hbm %s0, %s369
          %s371 = sshll.u32 %s364, 4
          %s372 = int_to_ptr.vmem [resolvable:$true] %s371
          %377 = dma.hbm_to_vmem [thread:$0]  %s370, 256, %s372, %s361, 128, 128, 8
        $region48: #{tpu_custom_call.1} parent=43 // pred_fallthru
          _
        // Predicated region
        $region49: #{tpu_custom_call.1} parent=43 // pred_check
          %p378 = pneg %p86
        $region50: #{tpu_custom_call.1} parent=43 // pred_check_branch
          %380 = sbr.rel (%p378) target = $region52
        $region51: #{tpu_custom_call.1} parent=43 // pred_region
          %s381 = sand.u32 %s26, 1
          %s382 = scalar_lea.sflag [#allocation7], %s381
          %s383 = sand.u32 %s76, 1
          %s384 = smul.addr %s383, 8
          %s385 = scalar_lea.vmem [#allocation6], %s384
          %s387 = ssub.s32 128, 128
          %388 = vsyncadd %s382, %s387
          %s389 = smul.addr %s33, 2
          %s390 = sadd.s32 %s34, %s389
          %s391 = smul.addr %s390, 128
          %s392 = scalar_lea.hbm %s1, %s391
          %s394 = sshll.u32 %s385, 4
          %s395 = int_to_ptr.vmem [resolvable:$true] %s394
          %397 = dma.hbm_to_vmem [thread:$0]  %s392, 128, %s395, %s382
        $region52: #{tpu_custom_call.1} parent=43 // pred_fallthru
          _
      $region44: #{tpu_custom_call.1} parent=5 // pred_fallthru
        _
      %p398 = scmp.le.s32.totalorder 1, %s26
      %p399 = scmp.lt.s32.totalorder %s26, 5
      %p400 = pnand %p398, %p399
      %p401 = pneg %p400
      // Predicated region
      $region53: #{tpu_custom_call.1} parent=5 // pred_check
        _
      $region54: #{tpu_custom_call.1} parent=5 // pred_check_branch
        %403 = sbr.rel (%p400) target = $region56
      $region55: #{tpu_custom_call.1} parent=5 // pred_region
        %s404 = ssub.s32 %s26, 1
        %s405 = sand.u32 %s51, 1
        %s406 = scalar_lea.sflag [#allocation4], %s405
        %s407 = sand.u32 %s51, 1
        %s408 = smul.addr %s407, 16
        %s409 = scalar_lea.vmem [#allocation3], %s408
        // Predicated region
        $region57: #{tpu_custom_call.1} parent=55 // pred_check
          %p410 = pneg %p64
        $region58: #{tpu_custom_call.1} parent=55 // pred_check_branch
          %412 = sbr.rel (%p410) target = $region60
        $region59: #{tpu_custom_call.1} parent=55 // pred_region
          %413 = dma.done %s406, 256
        $region60: #{tpu_custom_call.1} parent=55 // pred_fallthru
          _
        %s414 = sand.u32 %s31, 1
        %s415 = scalar_lea.sflag [#allocation7], %s414
        %s416 = sand.u32 %s79, 1
        %s417 = smul.addr %s416, 8
        %s418 = scalar_lea.vmem [#allocation6], %s417
        // Predicated region
        $region61: #{tpu_custom_call.1} parent=55 // pred_check
          %p419 = pneg %p92
        $region62: #{tpu_custom_call.1} parent=55 // pred_check_branch
          %421 = sbr.rel (%p419) target = $region64
        $region63: #{tpu_custom_call.1} parent=55 // pred_region
          %422 = dma.done %s415, 128
        $region64: #{tpu_custom_call.1} parent=55 // pred_fallthru
          _
        // Predicated region
        $region65: #{tpu_custom_call.1} parent=55 // pred_check
          %p423 = pneg %p113
        $region66: #{tpu_custom_call.1} parent=55 // pred_check_branch
          %425 = sbr.rel (%p423) target = $region68
        $region67: #{tpu_custom_call.1} parent=55 // pred_region
          %426 = dma.done [#allocation7], 1024
        $region68: #{tpu_custom_call.1} parent=55 // pred_fallthru
          _
        // Predicated region
        $region69: #{tpu_custom_call.1} parent=55 // pred_check
          %p427 = pneg %p134
        $region70: #{tpu_custom_call.1} parent=55 // pred_check_branch
          %429 = sbr.rel (%p427) target = $region72
        $region71: #{tpu_custom_call.1} parent=55 // pred_region
          %430 = dma.done [#allocation10], 2048
        $region72: #{tpu_custom_call.1} parent=55 // pred_fallthru
          _
        // Predicated region
        $region73: #{tpu_custom_call.1} parent=55 // pred_check
          %p431 = pneg %p155
        $region74: #{tpu_custom_call.1} parent=55 // pred_check_branch
          %433 = sbr.rel (%p431) target = $region76
        $region75: #{tpu_custom_call.1} parent=55 // pred_region
          %434 = dma.done [#allocation10], 1024
        $region76: #{tpu_custom_call.1} parent=55 // pred_fallthru
          _
        // Predicated region
        $region77: #{tpu_custom_call.1} parent=55 // pred_check
          %p435 = pneg %p218
        $region78: #{tpu_custom_call.1} parent=55 // pred_check_branch
          %437 = sbr.rel (%p435) target = $region80
        $region79: #{tpu_custom_call.1} parent=55 // pred_region
          %438 = dma.done [#allocation13], 8192
        $region80: #{tpu_custom_call.1} parent=55 // pred_fallthru
          _
        // Predicated region
        $region81: #{tpu_custom_call.1} parent=55 // pred_check
          %p439 = pneg %p239
        $region82: #{tpu_custom_call.1} parent=55 // pred_check_branch
          %441 = sbr.rel (%p439) target = $region84
        $region83: #{tpu_custom_call.1} parent=55 // pred_region
          %442 = dma.done [#allocation13], 4096
        $region84: #{tpu_custom_call.1} parent=55 // pred_fallthru
          _
        %s443 = sand.u32 %s51, 1
        %s444 = scalar_lea.sflag [#allocation4], %s443
        %s445 = sand.u32 %s51, 1
        %s446 = smul.addr %s445, 16
        %s447 = scalar_lea.vmem [#allocation3], %s446
        %p448 = pneg %p64
        %p449 = pneg %p61
        %s450 = sand.u32 %s31, 1
        %s451 = scalar_lea.sflag [#allocation7], %s450
        %s452 = sand.u32 %s79, 1
        %s453 = smul.addr %s452, 8
        %s454 = scalar_lea.vmem [#allocation6], %s453
        %p455 = pneg %p92
        %p456 = pneg %p89
        %p457 = pneg %p113
        %p458 = pneg %p110
        %p459 = pneg %p134
        %p460 = pneg %p131
        %p461 = pneg %p155
        %p462 = pneg %p152
        %p463 = pneg %p176
        %p464 = pneg %p173
        %p465 = pneg %p197
        %p466 = pneg %p194
        %p467 = pneg %p218
        %p468 = pneg %p215
        %p469 = pneg %p239
        %p470 = pneg %p236
        %p471 = pneg %p267
        %p472 = pneg %p264
        %s473 = sand.u32 %s254, 1
        %s474 = scalar_lea.sflag [#allocation5], %s473
        %s475 = sand.u32 %s254, 1
        %s476 = smul.addr %s475, 8
        %s477 = scalar_lea.vmem [#allocation15], %s476
        %v479 = vld [vmem:[%s5] sm:$0x1]
        %p480 = scmp.eq.s32.totalorder %s36, 0
        // Predicated region
        $region85: #{tpu_custom_call.1} parent=55 // pred_check
          %p481 = pneg %p480
        $region86: #{tpu_custom_call.1} parent=55 // pred_check_branch
          %483 = sbr.rel (%p481) target = $region88
        $region87: #{tpu_custom_call.1} parent=55 // pred_region
          %v484 = vld [vmem:[%s409] sm:$0xff]
          %v485 = vld [vmem:[%s409 + $0x8] sm:$0xff]
          %v486 = vmul.f32 %v484, %v484
          %v487 = vmul.f32 %v485, %v485
          %488 = vadd.xlane.f32.xlu0 %v486
          %v489 = vpop.xlane.xlu0 %488
          %490 = vadd.xlane.f32.xlu0 %v487
          %v491 = vpop.xlane.xlu0 %490
          %v492 = vrcp.pop 128.0
          %v493 = vmul.f32 %v489, %v492
          %v494 = vmul.f32 %v491, %v492
          %v495 = vadd.f32 %v493, 1e-06
          %v496 = vadd.f32 %v494, 1e-06
          %v497 = vrsqrt.pop %v495
          %v498 = vrsqrt.pop %v496
          %v499 = vmul.f32 %v484, %v497
          %v500 = vmul.f32 %v485, %v498
          %v502 = vlaneseq
          %v503 = vshrl.u32 %v502, 7
          %v504 = vsub.s32 0, %v503
          %v505 = vrot.slane %v479, %v504
          %v507 = vmul.f32 %v499, %v505
          %v508 = vmul.f32 %v500, %v505
          %v509 = vpack.c.bf16 %v508, %v507
          %v510 = vld [vmem:[#allocation9] sm:$0xff]
          %v511 = vld [vmem:[#allocation9 + $0x8] sm:$0xff]
          %v512 = vld [vmem:[#allocation9 + $0x10] sm:$0xff]
          %v513 = vld [vmem:[#allocation9 + $0x18] sm:$0xff]
          %v514 = vld [vmem:[#allocation9 + $0x20] sm:$0xff]
          %v515 = vld [vmem:[#allocation9 + $0x28] sm:$0xff]
          %v516 = vld [vmem:[#allocation9 + $0x30] sm:$0xff]
          %v517 = vld [vmem:[#allocation9 + $0x38] sm:$0xff]
          %v518 = vld [vmem:[#allocation9 + $0x40] sm:$0xff]
          %v519 = vld [vmem:[#allocation9 + $0x48] sm:$0xff]
          %v520 = vld [vmem:[#allocation9 + $0x50] sm:$0xff]
          %v521 = vld [vmem:[#allocation9 + $0x58] sm:$0xff]
          %v522 = vld [vmem:[#allocation9 + $0x60] sm:$0xff]
          %v523 = vld [vmem:[#allocation9 + $0x68] sm:$0xff]
          %v524 = vld [vmem:[#allocation9 + $0x70] sm:$0xff]
          %v525 = vld [vmem:[#allocation9 + $0x78] sm:$0xff]
          %v542 = vunpack.c.l.b16 %v510
          %v543 = vunpack.c.h.b16 %v510
          %v544 = vunpack.c.l.b16 %v511
          %v545 = vunpack.c.h.b16 %v511
          %v546 = vunpack.c.l.b16 %v512
          %v547 = vunpack.c.h.b16 %v512
          %v548 = vunpack.c.l.b16 %v513
          %v549 = vunpack.c.h.b16 %v513
          %v550 = vunpack.c.l.b16 %v514
          %v551 = vunpack.c.h.b16 %v514
          %v552 = vunpack.c.l.b16 %v515
          %v553 = vunpack.c.h.b16 %v515
          %v554 = vunpack.c.l.b16 %v516
          %v555 = vunpack.c.h.b16 %v516
          %v556 = vunpack.c.l.b16 %v517
          %v557 = vunpack.c.h.b16 %v517
          %v558 = vunpack.c.l.b16 %v518
          %v559 = vunpack.c.h.b16 %v518
          %v560 = vunpack.c.l.b16 %v519
          %v561 = vunpack.c.h.b16 %v519
          %v562 = vunpack.c.l.b16 %v520
          %v563 = vunpack.c.h.b16 %v520
          %v564 = vunpack.c.l.b16 %v521
          %v565 = vunpack.c.h.b16 %v521
          %v566 = vunpack.c.l.b16 %v522
          %v567 = vunpack.c.h.b16 %v522
          %v568 = vunpack.c.l.b16 %v523
          %v569 = vunpack.c.h.b16 %v523
          %v570 = vunpack.c.l.b16 %v524
          %v571 = vunpack.c.h.b16 %v524
          %v572 = vunpack.c.l.b16 %v525
          %v573 = vunpack.c.h.b16 %v525
          %v574 = vpack.c.b16 %v544, %v542
          %v575 = vpack.c.b16 %v545, %v543
          %v576 = vpack.c.b16 %v548, %v546
          %v577 = vpack.c.b16 %v549, %v547
          %v578 = vpack.c.b16 %v552, %v550
          %v579 = vpack.c.b16 %v553, %v551
          %v580 = vpack.c.b16 %v556, %v554
          %v581 = vpack.c.b16 %v557, %v555
          %v582 = vpack.c.b16 %v560, %v558
          %v583 = vpack.c.b16 %v561, %v559
          %v584 = vpack.c.b16 %v564, %v562
          %v585 = vpack.c.b16 %v565, %v563
          %v586 = vpack.c.b16 %v568, %v566
          %v587 = vpack.c.b16 %v569, %v567
          %v588 = vpack.c.b16 %v572, %v570
          %v589 = vpack.c.b16 %v573, %v571
          %606 = vmatprep.subr.bf16.mxu0 %v575
          %607 = vmatpush1.bf16.msra.mxu0 %v574
          %608 = vmatprep.subr.bf16.mxu0 %v577
          %609 = vmatpush1.bf16.msra.mxu0 %v576
          %610 = vmatprep.subr.bf16.mxu0 %v579
          %611 = vmatpush1.bf16.msra.mxu0 %v578
          %612 = vmatprep.subr.bf16.mxu0 %v581
          %613 = vmatpush1.bf16.msra.mxu0 %v580
          %614 = vmatprep.subr.bf16.mxu0 %v583
          %615 = vmatpush1.bf16.msra.mxu0 %v582
          %616 = vmatprep.subr.bf16.mxu0 %v585
          %617 = vmatpush1.bf16.msra.mxu0 %v584
          %618 = vmatprep.subr.bf16.mxu0 %v587
          %619 = vmatpush1.bf16.msra.mxu0 %v586
          %620 = vmatprep.subr.bf16.mxu0 %v589
          %621 = vmatpush1.bf16.msra.mxu0 %v588
          %622 = vmatprep.subr.bf16.mxu0 0
          %623 = vmatpush1.bf16.msra.mxu0 0
          %624 = vmatprep.subr.bf16.mxu0 0
          %625 = vmatpush1.bf16.msra.mxu0 0
          %626 = vmatprep.subr.bf16.mxu0 0
          %627 = vmatpush1.bf16.msra.mxu0 0
          %628 = vmatprep.subr.bf16.mxu0 0
          %629 = vmatpush1.bf16.msra.mxu0 0
          %630 = vmatprep.subr.bf16.mxu0 0
          %631 = vmatpush1.bf16.msra.mxu0 0
          %632 = vmatprep.subr.bf16.mxu0 0
          %633 = vmatpush1.bf16.msra.mxu0 0
          %634 = vmatprep.subr.bf16.mxu0 0
          %635 = vmatpush1.bf16.msra.mxu0 0
          %636 = vmatprep.subr.bf16.mxu0 0
          %637 = vmatpush1.bf16.msra.mxu0 0
          %638 = vmatprep.mubr.bf16.mxu0 0
          %639 = vmatmul.mubr.bf16.gmra.mrb[0].mxu0 %v509
          %v640 = vpop.f32.mrb[0].mxu0
          %v641 = vadd.f32 0.0, %v640
          %v642 = vpop.f32.mrb[0].mxu0
          %v643 = vadd.f32 0.0, %v642
          %v644 = vpop.f32.mrb[0].mxu0
          %v645 = vadd.f32 0.0, %v644
          %v646 = vpop.f32.mrb[0].mxu0
          %v647 = vadd.f32 0.0, %v646
          %648 = vdwg.mxu0
          %v649 = vpack.c.bf16 %v645, %v641
          %v650 = vpack.c.bf16 %v647, %v643
          %651 = vst [vmem:[#allocation2] sm:$0xff] %v649
          %652 = vst [vmem:[#allocation2 + $0x8] sm:$0xff] %v650
        $region88: #{tpu_custom_call.1} parent=55 // pred_fallthru
          _
        %s653 = smul.u32 %s36, 8
        %s654 = scalar_lea.vmem %s409, %s653 [#allocation3]
        %v655 = vld [vmem:[%s654] sm:$0xff]
        %v656 = vmul.f32 %v655, %v655
        %657 = vadd.xlane.f32.xlu0 %v656
        %v658 = vpop.xlane.xlu0 %657
        %v659 = vrcp.pop 128.0
        %v660 = vmul.f32 %v658, %v659
        %v661 = vadd.f32 %v660, 1e-06
        %v662 = vrsqrt.pop %v661
        %v663 = vmul.f32 %v655, %v662
        %v665 = vlaneseq
        %v666 = vshrl.u32 %v665, 7
        %v667 = vsub.s32 0, %v666
        %v668 = vrot.slane %v479, %v667
        %v670 = vmul.f32 %v663, %v668
        %v671 = vpack.c.bf16 %v670, %v670
        %v672 = vld [vmem:[#allocation8] sm:$0xf]
        %v673 = vld [vmem:[#allocation8 + $0x4] sm:$0xf]
        %v674 = vld [vmem:[#allocation8 + $0x8] sm:$0xf]
        %v675 = vld [vmem:[#allocation8 + $0xc] sm:$0xf]
        %v676 = vld [vmem:[#allocation8 + $0x10] sm:$0xf]
        %v677 = vld [vmem:[#allocation8 + $0x14] sm:$0xf]
        %v678 = vld [vmem:[#allocation8 + $0x18] sm:$0xf]
        %v679 = vld [vmem:[#allocation8 + $0x1c] sm:$0xf]
        %v680 = vld [vmem:[#allocation8 + $0x20] sm:$0xf]
        %v681 = vld [vmem:[#allocation8 + $0x24] sm:$0xf]
        %v682 = vld [vmem:[#allocation8 + $0x28] sm:$0xf]
        %v683 = vld [vmem:[#allocation8 + $0x2c] sm:$0xf]
        %v684 = vld [vmem:[#allocation8 + $0x30] sm:$0xf]
        %v685 = vld [vmem:[#allocation8 + $0x34] sm:$0xf]
        %v686 = vld [vmem:[#allocation8 + $0x38] sm:$0xf]
        %v687 = vld [vmem:[#allocation8 + $0x3c] sm:$0xf]
        %v704 = vunpack.c.l.b16 %v672
        %v705 = vunpack.c.l.b16 %v673
        %v706 = vunpack.c.l.b16 %v674
        %v707 = vunpack.c.l.b16 %v675
        %v708 = vunpack.c.l.b16 %v676
        %v709 = vunpack.c.l.b16 %v677
        %v710 = vunpack.c.l.b16 %v678
        %v711 = vunpack.c.l.b16 %v679
        %v712 = vunpack.c.l.b16 %v680
        %v713 = vunpack.c.l.b16 %v681
        %v714 = vunpack.c.l.b16 %v682
        %v715 = vunpack.c.l.b16 %v683
        %v716 = vunpack.c.l.b16 %v684
        %v717 = vunpack.c.l.b16 %v685
        %v718 = vunpack.c.l.b16 %v686
        %v719 = vunpack.c.l.b16 %v687
        %v720 = vpack.c.b16 %v705, %v704
        %v721 = vpack.c.b16 %v707, %v706
        %v722 = vpack.c.b16 %v709, %v708
        %v723 = vpack.c.b16 %v711, %v710
        %v724 = vpack.c.b16 %v713, %v712
        %v725 = vpack.c.b16 %v715, %v714
        %v726 = vpack.c.b16 %v717, %v716
        %v727 = vpack.c.b16 %v719, %v718
        %736 = vmatprep.subr.bf16.mxu0 0
        %737 = vmatpush1.bf16.msra.mxu0 %v720
        %738 = vmatprep.subr.bf16.mxu0 0
        %739 = vmatpush1.bf16.msra.mxu0 %v721
        %740 = vmatprep.subr.bf16.mxu0 0
        %741 = vmatpush1.bf16.msra.mxu0 %v722
        %742 = vmatprep.subr.bf16.mxu0 0
        %743 = vmatpush1.bf16.msra.mxu0 %v723
        %744 = vmatprep.subr.bf16.mxu0 0
        %745 = vmatpush1.bf16.msra.mxu0 %v724
        %746 = vmatprep.subr.bf16.mxu0 0
        %747 = vmatpush1.bf16.msra.mxu0 %v725
        %748 = vmatprep.subr.bf16.mxu0 0
        %749 = vmatpush1.bf16.msra.mxu0 %v726
        %750 = vmatprep.subr.bf16.mxu0 0
        %751 = vmatpush1.bf16.msra.mxu0 %v727
        %752 = vmatprep.subr.bf16.mxu0 0
        %753 = vmatpush1.bf16.msra.mxu0 0
        %754 = vmatprep.subr.bf16.mxu0 0
        %755 = vmatpush1.bf16.msra.mxu0 0
        %756 = vmatprep.subr.bf16.mxu0 0
        %757 = vmatpush1.bf16.msra.mxu0 0
        %758 = vmatprep.subr.bf16.mxu0 0
        %759 = vmatpush1.bf16.msra.mxu0 0
        %760 = vmatprep.subr.bf16.mxu0 0
        %761 = vmatpush1.bf16.msra.mxu0 0
        %762 = vmatprep.subr.bf16.mxu0 0
        %763 = vmatpush1.bf16.msra.mxu0 0
        %764 = vmatprep.subr.bf16.mxu0 0
        %765 = vmatpush1.bf16.msra.mxu0 0
        %766 = vmatprep.subr.bf16.mxu0 0
        %767 = vmatpush1.bf16.msra.mxu0 0
        %768 = vmatprep.mubr.bf16.mxu0 0
        %769 = vmatmul.mubr.bf16.gmra.mrb[0].mxu0 %v671
        %v770 = vpop.f32.mrb[0].mxu0
        %v771 = vadd.f32 0.0, %v770
        %v772 = vpop.f32.mrb[0].mxu0
        %v773 = vpop.f32.mrb[0].mxu0
        %v774 = vpop.f32.mrb[0].mxu0
        %775 = vdwg.mxu0
        %v776 = vpack.c.bf16 %v771, %v771
        %v777 = vld [vmem:[%s418] sm:$0xff]
        %vm778 = vcmp.eq.f32.partialorder %v777, 0.0
        %v779 = vsel %vm778, -3.4028235e+38, %v777
        %v780 = vld [vmem:[#allocation2] sm:$0xff]
        %v781 = vld [vmem:[#allocation2 + $0x8] sm:$0xff]
        %vm782 = vcmask 261120
        %v784 = vsel %vm782, %v776, 0
        %v787 = vsel %vm782, %v780, 0
        %789 = vmatprep.subr.bf16.mxu0 0
        %790 = vmatpush1.bf16.xpose.msra.mxu0 %v787
        %791 = vmatprep.subr.bf16.mxu0 0
        %792 = vmatpush1.bf16.xpose.msra.mxu0 0
        %793 = vmatprep.subr.bf16.mxu0 0
        %794 = vmatpush1.bf16.xpose.msra.mxu0 0
        %795 = vmatprep.subr.bf16.mxu0 0
        %796 = vmatpush1.bf16.xpose.msra.mxu0 0
        %797 = vmatprep.subr.bf16.mxu0 0
        %798 = vmatpush1.bf16.xpose.msra.mxu0 0
        %799 = vmatprep.subr.bf16.mxu0 0
        %800 = vmatpush1.bf16.xpose.msra.mxu0 0
        %801 = vmatprep.subr.bf16.mxu0 0
        %802 = vmatpush1.bf16.xpose.msra.mxu0 0
        %803 = vmatprep.subr.bf16.mxu0 0
        %804 = vmatpush1.bf16.xpose.msra.mxu0 0
        %805 = vmatprep.subr.bf16.mxu0 0
        %806 = vmatpush1.bf16.xpose.msra.mxu0 0
        %807 = vmatprep.subr.bf16.mxu0 0
        %808 = vmatpush1.bf16.xpose.msra.mxu0 0
        %809 = vmatprep.subr.bf16.mxu0 0
        %810 = vmatpush1.bf16.xpose.msra.mxu0 0
        %811 = vmatprep.subr.bf16.mxu0 0
        %812 = vmatpush1.bf16.xpose.msra.mxu0 0
        %813 = vmatprep.subr.bf16.mxu0 0
        %814 = vmatpush1.bf16.xpose.msra.mxu0 0
        %815 = vmatprep.subr.bf16.mxu0 0
        %816 = vmatpush1.bf16.xpose.msra.mxu0 0
        %817 = vmatprep.subr.bf16.mxu0 0
        %818 = vmatpush1.bf16.xpose.msra.mxu0 0
        %819 = vmatprep.subr.bf16.mxu0 0
        %820 = vmatpush1.bf16.xpose.msra.mxu0 0
        %821 = vmatprep.mubr.bf16.mxu0 0
        %822 = vmatmul.mubr.bf16.gmra.mrb[0].mxu0 %v784
        %v823 = vpop.f32.mrb[0].mxu0
        %v824 = vadd.f32 %v779, %v823
        %v825 = vpop.f32.mrb[0].mxu0
        %v826 = vpop.f32.mrb[0].mxu0
        %v827 = vpop.f32.mrb[0].mxu0
        %828 = vdwg.mxu0
        %vm829 = vcmask 130048
        %v830 = vsel %vm829, %v824, -inf
        %831 = vmax.xlane.f32.xlu0 %v830
        %v832 = vpop.xlane.xlu0 %831
        %v833 = vsub.f32 %v824, %v832
        %v834 = vmul.f32 %v833, 1.442695
        %v835 = vpow.pop %v834
        %v836 = vsel %vm829, %v835, 0.0
        %837 = vadd.xlane.f32.xlu0 %v836
        %v838 = vpop.xlane.xlu0 %837
        %v839 = vrcp.pop %v838
        %v840 = vmul.f32 %v835, %v839
        %v841 = vpack.c.bf16 %v840, %v840
        %v843 = vsel %vm829, %v841, 0
        %845 = vmatprep.subr.bf16.mxu0 0
        %846 = vmatpush1.bf16.msra.mxu0 %v781
        %847 = vmatprep.subr.bf16.mxu0 0
        %848 = vmatpush1.bf16.msra.mxu0 0
        %849 = vmatprep.subr.bf16.mxu0 0
        %850 = vmatpush1.bf16.msra.mxu0 0
        %851 = vmatprep.subr.bf16.mxu0 0
        %852 = vmatpush1.bf16.msra.mxu0 0
        %853 = vmatprep.subr.bf16.mxu0 0
        %854 = vmatpush1.bf16.msra.mxu0 0
        %855 = vmatprep.subr.bf16.mxu0 0
        %856 = vmatpush1.bf16.msra.mxu0 0
        %857 = vmatprep.subr.bf16.mxu0 0
        %858 = vmatpush1.bf16.msra.mxu0 0
        %859 = vmatprep.subr.bf16.mxu0 0
        %860 = vmatpush1.bf16.msra.mxu0 0
        %861 = vmatprep.subr.bf16.mxu0 0
        %862 = vmatpush1.bf16.msra.mxu0 0
        %863 = vmatprep.subr.bf16.mxu0 0
        %864 = vmatpush1.bf16.msra.mxu0 0
        %865 = vmatprep.subr.bf16.mxu0 0
        %866 = vmatpush1.bf16.msra.mxu0 0
        %867 = vmatprep.subr.bf16.mxu0 0
        %868 = vmatpush1.bf16.msra.mxu0 0
        %869 = vmatprep.subr.bf16.mxu0 0
        %870 = vmatpush1.bf16.msra.mxu0 0
        %871 = vmatprep.subr.bf16.mxu0 0
        %872 = vmatpush1.bf16.msra.mxu0 0
        %873 = vmatprep.subr.bf16.mxu0 0
        %874 = vmatpush1.bf16.msra.mxu0 0
        %875 = vmatprep.subr.bf16.mxu0 0
        %876 = vmatpush1.bf16.msra.mxu0 0
        %877 = vmatprep.mubr.bf16.mxu0 0
        %878 = vmatmul.mubr.bf16.gmra.mrb[0].mxu0 %v843
        %v879 = vpop.f32.mrb[0].mxu0
        %v880 = vadd.f32 0.0, %v879
        %v881 = vpop.f32.mrb[0].mxu0
        %v882 = vpop.f32.mrb[0].mxu0
        %v883 = vpop.f32.mrb[0].mxu0
        %884 = vdwg.mxu0
        %886 = vrot.lane.b32.xlu0 %v776, 96
        %v887 = vpop.permute.xlu0 %886
        %889 = vrot.lane.b32.xlu0 %v780, 96
        %v890 = vpop.permute.xlu0 %889
        %v892 = vsel %vm782, %v887, 0
        %v895 = vsel %vm782, %v890, 0
        %897 = vmatprep.subr.bf16.mxu0 0
        %898 = vmatpush1.bf16.xpose.msra.mxu0 %v895
        %899 = vmatprep.subr.bf16.mxu0 0
        %900 = vmatpush1.bf16.xpose.msra.mxu0 0
        %901 = vmatprep.subr.bf16.mxu0 0
        %902 = vmatpush1.bf16.xpose.msra.mxu0 0
        %903 = vmatprep.subr.bf16.mxu0 0
        %904 = vmatpush1.bf16.xpose.msra.mxu0 0
        %905 = vmatprep.subr.bf16.mxu0 0
        %906 = vmatpush1.bf16.xpose.msra.mxu0 0
        %907 = vmatprep.subr.bf16.mxu0 0
        %908 = vmatpush1.bf16.xpose.msra.mxu0 0
        %909 = vmatprep.subr.bf16.mxu0 0
        %910 = vmatpush1.bf16.xpose.msra.mxu0 0
        %911 = vmatprep.subr.bf16.mxu0 0
        %912 = vmatpush1.bf16.xpose.msra.mxu0 0
        %913 = vmatprep.subr.bf16.mxu0 0
        %914 = vmatpush1.bf16.xpose.msra.mxu0 0
        %915 = vmatprep.subr.bf16.mxu0 0
        %916 = vmatpush1.bf16.xpose.msra.mxu0 0
        %917 = vmatprep.subr.bf16.mxu0 0
        %918 = vmatpush1.bf16.xpose.msra.mxu0 0
        %919 = vmatprep.subr.bf16.mxu0 0
        %920 = vmatpush1.bf16.xpose.msra.mxu0 0
        %921 = vmatprep.subr.bf16.mxu0 0
        %922 = vmatpush1.bf16.xpose.msra.mxu0 0
        %923 = vmatprep.subr.bf16.mxu0 0
        %924 = vmatpush1.bf16.xpose.msra.mxu0 0
        %925 = vmatprep.subr.bf16.mxu0 0
        %926 = vmatpush1.bf16.xpose.msra.mxu0 0
        %927 = vmatprep.subr.bf16.mxu0 0
        %928 = vmatpush1.bf16.xpose.msra.mxu0 0
        %929 = vmatprep.mubr.bf16.mxu0 0
        %930 = vmatmul.mubr.bf16.gmra.mrb[0].mxu0 %v892
        %v931 = vpop.f32.mrb[0].mxu0
        %v932 = vadd.f32 %v779, %v931
        %v933 = vpop.f32.mrb[0].mxu0
        %v934 = vpop.f32.mrb[0].mxu0
        %v935 = vpop.f32.mrb[0].mxu0
        %936 = vdwg.mxu0
        %v937 = vsel %vm829, %v932, -inf
        %938 = vmax.xlane.f32.xlu0 %v937
        %v939 = vpop.xlane.xlu0 %938
        %v940 = vsub.f32 %v932, %v939
        %v941 = vmul.f32 %v940, 1.442695
        %v942 = vpow.pop %v941
        %v943 = vsel %vm829, %v942, 0.0
        %944 = vadd.xlane.f32.xlu0 %v943
        %v945 = vpop.xlane.xlu0 %944
        %v946 = vrcp.pop %v945
        %v947 = vmul.f32 %v942, %v946
        %v948 = vpack.c.bf16 %v947, %v947
        %950 = vrot.lane.b32.xlu0 %v781, 96
        %v951 = vpop.permute.xlu0 %950
        %v954 = vsel %vm829, %v948, 0
        %956 = vmatprep.subr.bf16.mxu0 0
        %957 = vmatpush1.bf16.msra.mxu0 %v951
        %958 = vmatprep.subr.bf16.mxu0 0
        %959 = vmatpush1.bf16.msra.mxu0 0
        %960 = vmatprep.subr.bf16.mxu0 0
        %961 = vmatpush1.bf16.msra.mxu0 0
        %962 = vmatprep.subr.bf16.mxu0 0
        %963 = vmatpush1.bf16.msra.mxu0 0
        %964 = vmatprep.subr.bf16.mxu0 0
        %965 = vmatpush1.bf16.msra.mxu0 0
        %966 = vmatprep.subr.bf16.mxu0 0
        %967 = vmatpush1.bf16.msra.mxu0 0
        %968 = vmatprep.subr.bf16.mxu0 0
        %969 = vmatpush1.bf16.msra.mxu0 0
        %970 = vmatprep.subr.bf16.mxu0 0
        %971 = vmatpush1.bf16.msra.mxu0 0
        %972 = vmatprep.subr.bf16.mxu0 0
        %973 = vmatpush1.bf16.msra.mxu0 0
        %974 = vmatprep.subr.bf16.mxu0 0
        %975 = vmatpush1.bf16.msra.mxu0 0
        %976 = vmatprep.subr.bf16.mxu0 0
        %977 = vmatpush1.bf16.msra.mxu0 0
        %978 = vmatprep.subr.bf16.mxu0 0
        %979 = vmatpush1.bf16.msra.mxu0 0
        %980 = vmatprep.subr.bf16.mxu0 0
        %981 = vmatpush1.bf16.msra.mxu0 0
        %982 = vmatprep.subr.bf16.mxu0 0
        %983 = vmatpush1.bf16.msra.mxu0 0
        %984 = vmatprep.subr.bf16.mxu0 0
        %985 = vmatpush1.bf16.msra.mxu0 0
        %986 = vmatprep.subr.bf16.mxu0 0
        %987 = vmatpush1.bf16.msra.mxu0 0
        %988 = vmatprep.mubr.bf16.mxu0 0
        %989 = vmatmul.mubr.bf16.gmra.mrb[0].mxu0 %v954
        %v990 = vpop.f32.mrb[0].mxu0
        %v991 = vadd.f32 0.0, %v990
        %v992 = vpop.f32.mrb[0].mxu0
        %v993 = vpop.f32.mrb[0].mxu0
        %v994 = vpop.f32.mrb[0].mxu0
        %995 = vdwg.mxu0
        %996 = vrot.lane.b32.xlu0 %v776, 64
        %v997 = vpop.permute.xlu0 %996
        %998 = vrot.lane.b32.xlu0 %v780, 64
        %v999 = vpop.permute.xlu0 %998
        %v1001 = vsel %vm782, %v997, 0
        %v1004 = vsel %vm782, %v999, 0
        %1006 = vmatprep.subr.bf16.mxu0 0
        %1007 = vmatpush1.bf16.xpose.msra.mxu0 %v1004
        %1008 = vmatprep.subr.bf16.mxu0 0
        %1009 = vmatpush1.bf16.xpose.msra.mxu0 0
        %1010 = vmatprep.subr.bf16.mxu0 0
        %1011 = vmatpush1.bf16.xpose.msra.mxu0 0
        %1012 = vmatprep.subr.bf16.mxu0 0
        %1013 = vmatpush1.bf16.xpose.msra.mxu0 0
        %1014 = vmatprep.subr.bf16.mxu0 0
        %1015 = vmatpush1.bf16.xpose.msra.mxu0 0
        %1016 = vmatprep.subr.bf16.mxu0 0
        %1017 = vmatpush1.bf16.xpose.msra.mxu0 0
        %1018 = vmatprep.subr.bf16.mxu0 0
        %1019 = vmatpush1.bf16.xpose.msra.mxu0 0
        %1020 = vmatprep.subr.bf16.mxu0 0
        %1021 = vmatpush1.bf16.xpose.msra.mxu0 0
        %1022 = vmatprep.subr.bf16.mxu0 0
        %1023 = vmatpush1.bf16.xpose.msra.mxu0 0
        %1024 = vmatprep.subr.bf16.mxu0 0
        %1025 = vmatpush1.bf16.xpose.msra.mxu0 0
        %1026 = vmatprep.subr.bf16.mxu0 0
        %1027 = vmatpush1.bf16.xpose.msra.mxu0 0
        %1028 = vmatprep.subr.bf16.mxu0 0
        %1029 = vmatpush1.bf16.xpose.msra.mxu0 0
        %1030 = vmatprep.subr.bf16.mxu0 0
        %1031 = vmatpush1.bf16.xpose.msra.mxu0 0
        %1032 = vmatprep.subr.bf16.mxu0 0
        %1033 = vmatpush1.bf16.xpose.msra.mxu0 0
        %1034 = vmatprep.subr.bf16.mxu0 0
        %1035 = vmatpush1.bf16.xpose.msra.mxu0 0
        %1036 = vmatprep.subr.bf16.mxu0 0
        %1037 = vmatpush1.bf16.xpose.msra.mxu0 0
        %1038 = vmatprep.mubr.bf16.mxu0 0
        %1039 = vmatmul.mubr.bf16.gmra.mrb[0].mxu0 %v1001
        %v1040 = vpop.f32.mrb[0].mxu0
        %v1041 = vadd.f32 %v779, %v1040
        %v1042 = vpop.f32.mrb[0].mxu0
        %v1043 = vpop.f32.mrb[0].mxu0
        %v1044 = vpop.f32.mrb[0].mxu0
        %1045 = vdwg.mxu0
        %v1046 = vsel %vm829, %v1041, -inf
        %1047 = vmax.xlane.f32.xlu0 %v1046
        %v1048 = vpop.xlane.xlu0 %1047
        %v1049 = vsub.f32 %v1041, %v1048
        %v1050 = vmul.f32 %v1049, 1.442695
        %v1051 = vpow.pop %v1050
        %v1052 = vsel %vm829, %v1051, 0.0
        %1053 = vadd.xlane.f32.xlu0 %v1052
        %v1054 = vpop.xlane.xlu0 %1053
        %v1055 = vrcp.pop %v1054
        %v1056 = vmul.f32 %v1051, %v1055
        %v1057 = vpack.c.bf16 %v1056, %v1056
        %1058 = vrot.lane.b32.xlu0 %v781, 64
        %v1059 = vpop.permute.xlu0 %1058
        %v1062 = vsel %vm829, %v1057, 0
        %1064 = vmatprep.subr.bf16.mxu0 0
        %1065 = vmatpush1.bf16.msra.mxu0 %v1059
        %1066 = vmatprep.subr.bf16.mxu0 0
        %1067 = vmatpush1.bf16.msra.mxu0 0
        %1068 = vmatprep.subr.bf16.mxu0 0
        %1069 = vmatpush1.bf16.msra.mxu0 0
        %1070 = vmatprep.subr.bf16.mxu0 0
        %1071 = vmatpush1.bf16.msra.mxu0 0
        %1072 = vmatprep.subr.bf16.mxu0 0
        %1073 = vmatpush1.bf16.msra.mxu0 0
        %1074 = vmatprep.subr.bf16.mxu0 0
        %1075 = vmatpush1.bf16.msra.mxu0 0
        %1076 = vmatprep.subr.bf16.mxu0 0
        %1077 = vmatpush1.bf16.msra.mxu0 0
        %1078 = vmatprep.subr.bf16.mxu0 0
        %1079 = vmatpush1.bf16.msra.mxu0 0
        %1080 = vmatprep.subr.bf16.mxu0 0
        %1081 = vmatpush1.bf16.msra.mxu0 0
        %1082 = vmatprep.subr.bf16.mxu0 0
        %1083 = vmatpush1.bf16.msra.mxu0 0
        %1084 = vmatprep.subr.bf16.mxu0 0
        %1085 = vmatpush1.bf16.msra.mxu0 0
        %1086 = vmatprep.subr.bf16.mxu0 0
        %1087 = vmatpush1.bf16.msra.mxu0 0
        %1088 = vmatprep.subr.bf16.mxu0 0
        %1089 = vmatpush1.bf16.msra.mxu0 0
        %1090 = vmatprep.subr.bf16.mxu0 0
        %1091 = vmatpush1.bf16.msra.mxu0 0
        %1092 = vmatprep.subr.bf16.mxu0 0
        %1093 = vmatpush1.bf16.msra.mxu0 0
        %1094 = vmatprep.subr.bf16.mxu0 0
        %1095 = vmatpush1.bf16.msra.mxu0 0
        %1096 = vmatprep.mubr.bf16.mxu0 0
        %1097 = vmatmul.mubr.bf16.gmra.mrb[0].mxu0 %v1062
        %v1098 = vpop.f32.mrb[0].mxu0
        %v1099 = vadd.f32 0.0, %v1098
        %v1100 = vpop.f32.mrb[0].mxu0
        %v1101 = vpop.f32.mrb[0].mxu0
        %v1102 = vpop.f32.mrb[0].mxu0
        %1103 = vdwg.mxu0
        %1104 = vrot.lane.b32.xlu0 %v776, 32
        %v1105 = vpop.permute.xlu0 %1104
        %1106 = vrot.lane.b32.xlu0 %v780, 32
        %v1107 = vpop.permute.xlu0 %1106
        %v1109 = vsel %vm782, %v1105, 0
        %v1112 = vsel %vm782, %v1107, 0
        %1114 = vmatprep.subr.bf16.mxu0 0
        %1115 = vmatpush1.bf16.xpose.msra.mxu0 %v1112
        %1116 = vmatprep.subr.bf16.mxu0 0
        %1117 = vmatpush1.bf16.xpose.msra.mxu0 0
        %1118 = vmatprep.subr.bf16.mxu0 0
        %1119 = vmatpush1.bf16.xpose.msra.mxu0 0
        %1120 = vmatprep.subr.bf16.mxu0 0
        %1121 = vmatpush1.bf16.xpose.msra.mxu0 0
        %1122 = vmatprep.subr.bf16.mxu0 0
        %1123 = vmatpush1.bf16.xpose.msra.mxu0 0
        %1124 = vmatprep.subr.bf16.mxu0 0
        %1125 = vmatpush1.bf16.xpose.msra.mxu0 0
        %1126 = vmatprep.subr.bf16.mxu0 0
        %1127 = vmatpush1.bf16.xpose.msra.mxu0 0
        %1128 = vmatprep.subr.bf16.mxu0 0
        %1129 = vmatpush1.bf16.xpose.msra.mxu0 0
        %1130 = vmatprep.subr.bf16.mxu0 0
        %1131 = vmatpush1.bf16.xpose.msra.mxu0 0
        %1132 = vmatprep.subr.bf16.mxu0 0
        %1133 = vmatpush1.bf16.xpose.msra.mxu0 0
        %1134 = vmatprep.subr.bf16.mxu0 0
        %1135 = vmatpush1.bf16.xpose.msra.mxu0 0
        %1136 = vmatprep.subr.bf16.mxu0 0
        %1137 = vmatpush1.bf16.xpose.msra.mxu0 0
        %1138 = vmatprep.subr.bf16.mxu0 0
        %1139 = vmatpush1.bf16.xpose.msra.mxu0 0
        %1140 = vmatprep.subr.bf16.mxu0 0
        %1141 = vmatpush1.bf16.xpose.msra.mxu0 0
        %1142 = vmatprep.subr.bf16.mxu0 0
        %1143 = vmatpush1.bf16.xpose.msra.mxu0 0
        %1144 = vmatprep.subr.bf16.mxu0 0
        %1145 = vmatpush1.bf16.xpose.msra.mxu0 0
        %1146 = vmatprep.mubr.bf16.mxu0 0
        %1147 = vmatmul.mubr.bf16.gmra.mrb[0].mxu0 %v1109
        %v1148 = vpop.f32.mrb[0].mxu0
        %v1149 = vadd.f32 %v779, %v1148
        %v1150 = vpop.f32.mrb[0].mxu0
        %v1151 = vpop.f32.mrb[0].mxu0
        %v1152 = vpop.f32.mrb[0].mxu0
        %1153 = vdwg.mxu0
        %v1154 = vsel %vm829, %v1149, -inf
        %1155 = vmax.xlane.f32.xlu0 %v1154
        %v1156 = vpop.xlane.xlu0 %1155
        %v1157 = vsub.f32 %v1149, %v1156
        %v1158 = vmul.f32 %v1157, 1.442695
        %v1159 = vpow.pop %v1158
        %v1160 = vsel %vm829, %v1159, 0.0
        %1161 = vadd.xlane.f32.xlu0 %v1160
        %v1162 = vpop.xlane.xlu0 %1161
        %v1163 = vrcp.pop %v1162
        %v1164 = vmul.f32 %v1159, %v1163
        %v1165 = vpack.c.bf16 %v1164, %v1164
        %1166 = vrot.lane.b32.xlu0 %v781, 32
        %v1167 = vpop.permute.xlu0 %1166
        %v1170 = vsel %vm829, %v1165, 0
        %1172 = vmatprep.subr.bf16.mxu0 0
        %1173 = vmatpush1.bf16.msra.mxu0 %v1167
        %1174 = vmatprep.subr.bf16.mxu0 0
        %1175 = vmatpush1.bf16.msra.mxu0 0
        %1176 = vmatprep.subr.bf16.mxu0 0
        %1177 = vmatpush1.bf16.msra.mxu0 0
        %1178 = vmatprep.subr.bf16.mxu0 0
        %1179 = vmatpush1.bf16.msra.mxu0 0
        %1180 = vmatprep.subr.bf16.mxu0 0
        %1181 = vmatpush1.bf16.msra.mxu0 0
        %1182 = vmatprep.subr.bf16.mxu0 0
        %1183 = vmatpush1.bf16.msra.mxu0 0
        %1184 = vmatprep.subr.bf16.mxu0 0
        %1185 = vmatpush1.bf16.msra.mxu0 0
        %1186 = vmatprep.subr.bf16.mxu0 0
        %1187 = vmatpush1.bf16.msra.mxu0 0
        %1188 = vmatprep.subr.bf16.mxu0 0
        %1189 = vmatpush1.bf16.msra.mxu0 0
        %1190 = vmatprep.subr.bf16.mxu0 0
        %1191 = vmatpush1.bf16.msra.mxu0 0
        %1192 = vmatprep.subr.bf16.mxu0 0
        %1193 = vmatpush1.bf16.msra.mxu0 0
        %1194 = vmatprep.subr.bf16.mxu0 0
        %1195 = vmatpush1.bf16.msra.mxu0 0
        %1196 = vmatprep.subr.bf16.mxu0 0
        %1197 = vmatpush1.bf16.msra.mxu0 0
        %1198 = vmatprep.subr.bf16.mxu0 0
        %1199 = vmatpush1.bf16.msra.mxu0 0
        %1200 = vmatprep.subr.bf16.mxu0 0
        %1201 = vmatpush1.bf16.msra.mxu0 0
        %1202 = vmatprep.subr.bf16.mxu0 0
        %1203 = vmatpush1.bf16.msra.mxu0 0
        %1204 = vmatprep.mubr.bf16.mxu0 0
        %1205 = vmatmul.mubr.bf16.gmra.mrb[0].mxu0 %v1170
        %v1206 = vpop.f32.mrb[0].mxu0
        %v1207 = vadd.f32 0.0, %v1206
        %v1208 = vpop.f32.mrb[0].mxu0
        %v1209 = vpop.f32.mrb[0].mxu0
        %v1210 = vpop.f32.mrb[0].mxu0
        %1211 = vdwg.mxu0
        %1213 = vrot.lane.b32.xlu0 %v991, 32
        %v1214 = vpop.permute.xlu0 %1213
        %1217 = vrot.lane.b32.xlu0 %v1099, 64
        %v1218 = vpop.permute.xlu0 %1217
        %1221 = vrot.lane.b32.xlu0 %v1207, 96
        %v1222 = vpop.permute.xlu0 %1221
        %v1224 = vsel %vm782, %v880, %v1214
        %vm1225 = vcmask 523264
        %v1226 = vsel %vm1225, %v1224, %v1218
        %vm1227 = vcmask 785408
        %v1228 = vsel %vm1227, %v1226, %v1222
        %v1229 = vpack.c.bf16 %v1228, %v1228
        %v1230 = vld [vmem:[#allocation11] sm:$0xf]
        %v1231 = vld [vmem:[#allocation11 + $0x4] sm:$0xf]
        %v1232 = vld [vmem:[#allocation11 + $0x8] sm:$0xf]
        %v1233 = vld [vmem:[#allocation11 + $0xc] sm:$0xf]
        %v1234 = vld [vmem:[#allocation11 + $0x10] sm:$0xf]
        %v1235 = vld [vmem:[#allocation11 + $0x14] sm:$0xf]
        %v1236 = vld [vmem:[#allocation11 + $0x18] sm:$0xf]
        %v1237 = vld [vmem:[#allocation11 + $0x1c] sm:$0xf]
        %v1238 = vld [vmem:[#allocation11 + $0x20] sm:$0xf]
        %v1239 = vld [vmem:[#allocation11 + $0x24] sm:$0xf]
        %v1240 = vld [vmem:[#allocation11 + $0x28] sm:$0xf]
        %v1241 = vld [vmem:[#allocation11 + $0x2c] sm:$0xf]
        %v1242 = vld [vmem:[#allocation11 + $0x30] sm:$0xf]
        %v1243 = vld [vmem:[#allocation11 + $0x34] sm:$0xf]
        %v1244 = vld [vmem:[#allocation11 + $0x38] sm:$0xf]
        %v1245 = vld [vmem:[#allocation11 + $0x3c] sm:$0xf]
        %v1262 = vunpack.c.l.b16 %v1230
        %v1263 = vunpack.c.l.b16 %v1231
        %v1264 = vunpack.c.l.b16 %v1232
        %v1265 = vunpack.c.l.b16 %v1233
        %v1266 = vunpack.c.l.b16 %v1234
        %v1267 = vunpack.c.l.b16 %v1235
        %v1268 = vunpack.c.l.b16 %v1236
        %v1269 = vunpack.c.l.b16 %v1237
        %v1270 = vunpack.c.l.b16 %v1238
        %v1271 = vunpack.c.l.b16 %v1239
        %v1272 = vunpack.c.l.b16 %v1240
        %v1273 = vunpack.c.l.b16 %v1241
        %v1274 = vunpack.c.l.b16 %v1242
        %v1275 = vunpack.c.l.b16 %v1243
        %v1276 = vunpack.c.l.b16 %v1244
        %v1277 = vunpack.c.l.b16 %v1245
        %v1278 = vpack.c.b16 %v1263, %v1262
        %v1279 = vpack.c.b16 %v1265, %v1264
        %v1280 = vpack.c.b16 %v1267, %v1266
        %v1281 = vpack.c.b16 %v1269, %v1268
        %v1282 = vpack.c.b16 %v1271, %v1270
        %v1283 = vpack.c.b16 %v1273, %v1272
        %v1284 = vpack.c.b16 %v1275, %v1274
        %v1285 = vpack.c.b16 %v1277, %v1276
        %1294 = vmatprep.subr.bf16.mxu0 0
        %1295 = vmatpush1.bf16.msra.mxu0 %v1278
        %1296 = vmatprep.subr.bf16.mxu0 0
        %1297 = vmatpush1.bf16.msra.mxu0 %v1279
        %1298 = vmatprep.subr.bf16.mxu0 0
        %1299 = vmatpush1.bf16.msra.mxu0 %v1280
        %1300 = vmatprep.subr.bf16.mxu0 0
        %1301 = vmatpush1.bf16.msra.mxu0 %v1281
        %1302 = vmatprep.subr.bf16.mxu0 0
        %1303 = vmatpush1.bf16.msra.mxu0 %v1282
        %1304 = vmatprep.subr.bf16.mxu0 0
        %1305 = vmatpush1.bf16.msra.mxu0 %v1283
        %1306 = vmatprep.subr.bf16.mxu0 0
        %1307 = vmatpush1.bf16.msra.mxu0 %v1284
        %1308 = vmatprep.subr.bf16.mxu0 0
        %1309 = vmatpush1.bf16.msra.mxu0 %v1285
        %1310 = vmatprep.subr.bf16.mxu0 0
        %1311 = vmatpush1.bf16.msra.mxu0 0
        %1312 = vmatprep.subr.bf16.mxu0 0
        %1313 = vmatpush1.bf16.msra.mxu0 0
        %1314 = vmatprep.subr.bf16.mxu0 0
        %1315 = vmatpush1.bf16.msra.mxu0 0
        %1316 = vmatprep.subr.bf16.mxu0 0
        %1317 = vmatpush1.bf16.msra.mxu0 0
        %1318 = vmatprep.subr.bf16.mxu0 0
        %1319 = vmatpush1.bf16.msra.mxu0 0
        %1320 = vmatprep.subr.bf16.mxu0 0
        %1321 = vmatpush1.bf16.msra.mxu0 0
        %1322 = vmatprep.subr.bf16.mxu0 0
        %1323 = vmatpush1.bf16.msra.mxu0 0
        %1324 = vmatprep.subr.bf16.mxu0 0
        %1325 = vmatpush1.bf16.msra.mxu0 0
        %1326 = vmatprep.mubr.bf16.mxu0 0
        %1327 = vmatmul.mubr.bf16.gmra.mrb[0].mxu0 %v1229
        %v1328 = vpop.f32.mrb[0].mxu0
        %v1329 = vadd.f32 %v655, %v1328
        %v1330 = vpop.f32.mrb[0].mxu0
        %v1331 = vpop.f32.mrb[0].mxu0
        %v1332 = vpop.f32.mrb[0].mxu0
        %1333 = vdwg.mxu0
        %v1334 = vld [vmem:[%s6] sm:$0x1]
        %v1335 = vmul.f32 %v1329, %v1329
        %1336 = vadd.xlane.f32.xlu0 %v1335
        %v1337 = vpop.xlane.xlu0 %1336
        %v1338 = vmul.f32 %v1337, %v659
        %v1339 = vadd.f32 %v1338, 1e-06
        %v1340 = vrsqrt.pop %v1339
        %v1341 = vmul.f32 %v1329, %v1340
        %v1343 = vlaneseq
        %v1344 = vshrl.u32 %v1343, 7
        %v1345 = vsub.s32 0, %v1344
        %v1346 = vrot.slane %v1334, %v1345
        %v1348 = vmul.f32 %v1341, %v1346
        %v1349 = vpack.c.bf16 %v1348, %v1348
        %v1350 = vld [vmem:[#allocation12] sm:$0xff]
        %v1351 = vld [vmem:[#allocation12 + $0x8] sm:$0xff]
        %v1352 = vld [vmem:[#allocation12 + $0x10] sm:$0xff]
        %v1353 = vld [vmem:[#allocation12 + $0x18] sm:$0xff]
        %v1354 = vld [vmem:[#allocation12 + $0x20] sm:$0xff]
        %v1355 = vld [vmem:[#allocation12 + $0x28] sm:$0xff]
        %v1356 = vld [vmem:[#allocation12 + $0x30] sm:$0xff]
        %v1357 = vld [vmem:[#allocation12 + $0x38] sm:$0xff]
        %v1358 = vld [vmem:[#allocation12 + $0x40] sm:$0xff]
        %v1359 = vld [vmem:[#allocation12 + $0x48] sm:$0xff]
        %v1360 = vld [vmem:[#allocation12 + $0x50] sm:$0xff]
        %v1361 = vld [vmem:[#allocation12 + $0x58] sm:$0xff]
        %v1362 = vld [vmem:[#allocation12 + $0x60] sm:$0xff]
        %v1363 = vld [vmem:[#allocation12 + $0x68] sm:$0xff]
        %v1364 = vld [vmem:[#allocation12 + $0x70] sm:$0xff]
        %v1365 = vld [vmem:[#allocation12 + $0x78] sm:$0xff]
        %v1366 = vld [vmem:[#allocation12 + $0x80] sm:$0xff]
        %v1367 = vld [vmem:[#allocation12 + $0x88] sm:$0xff]
        %v1368 = vld [vmem:[#allocation12 + $0x90] sm:$0xff]
        %v1369 = vld [vmem:[#allocation12 + $0x98] sm:$0xff]
        %v1370 = vld [vmem:[#allocation12 + $0xa0] sm:$0xff]
        %v1371 = vld [vmem:[#allocation12 + $0xa8] sm:$0xff]
        %v1372 = vld [vmem:[#allocation12 + $0xb0] sm:$0xff]
        %v1373 = vld [vmem:[#allocation12 + $0xb8] sm:$0xff]
        %v1374 = vld [vmem:[#allocation12 + $0xc0] sm:$0xff]
        %v1375 = vld [vmem:[#allocation12 + $0xc8] sm:$0xff]
        %v1376 = vld [vmem:[#allocation12 + $0xd0] sm:$0xff]
        %v1377 = vld [vmem:[#allocation12 + $0xd8] sm:$0xff]
        %v1378 = vld [vmem:[#allocation12 + $0xe0] sm:$0xff]
        %v1379 = vld [vmem:[#allocation12 + $0xe8] sm:$0xff]
        %v1380 = vld [vmem:[#allocation12 + $0xf0] sm:$0xff]
        %v1381 = vld [vmem:[#allocation12 + $0xf8] sm:$0xff]
        %v1382 = vld [vmem:[#allocation12 + $0x100] sm:$0xff]
        %v1383 = vld [vmem:[#allocation12 + $0x108] sm:$0xff]
        %v1384 = vld [vmem:[#allocation12 + $0x110] sm:$0xff]
        %v1385 = vld [vmem:[#allocation12 + $0x118] sm:$0xff]
        %v1386 = vld [vmem:[#allocation12 + $0x120] sm:$0xff]
        %v1387 = vld [vmem:[#allocation12 + $0x128] sm:$0xff]
        %v1388 = vld [vmem:[#allocation12 + $0x130] sm:$0xff]
        %v1389 = vld [vmem:[#allocation12 + $0x138] sm:$0xff]
        %v1390 = vld [vmem:[#allocation12 + $0x140] sm:$0xff]
        %v1391 = vld [vmem:[#allocation12 + $0x148] sm:$0xff]
        %v1392 = vld [vmem:[#allocation12 + $0x150] sm:$0xff]
        %v1393 = vld [vmem:[#allocation12 + $0x158] sm:$0xff]
        %v1394 = vld [vmem:[#allocation12 + $0x160] sm:$0xff]
        %v1395 = vld [vmem:[#allocation12 + $0x168] sm:$0xff]
        %v1396 = vld [vmem:[#allocation12 + $0x170] sm:$0xff]
        %v1397 = vld [vmem:[#allocation12 + $0x178] sm:$0xff]
        %v1398 = vld [vmem:[#allocation12 + $0x180] sm:$0xff]
        %v1399 = vld [vmem:[#allocation12 + $0x188] sm:$0xff]
        %v1400 = vld [vmem:[#allocation12 + $0x190] sm:$0xff]
        %v1401 = vld [vmem:[#allocation12 + $0x198] sm:$0xff]
        %v1402 = vld [vmem:[#allocation12 + $0x1a0] sm:$0xff]
        %v1403 = vld [vmem:[#allocation12 + $0x1a8] sm:$0xff]
        %v1404 = vld [vmem:[#allocation12 + $0x1b0] sm:$0xff]
        %v1405 = vld [vmem:[#allocation12 + $0x1b8] sm:$0xff]
        %v1406 = vld [vmem:[#allocation12 + $0x1c0] sm:$0xff]
        %v1407 = vld [vmem:[#allocation12 + $0x1c8] sm:$0xff]
        %v1408 = vld [vmem:[#allocation12 + $0x1d0] sm:$0xff]
        %v1409 = vld [vmem:[#allocation12 + $0x1d8] sm:$0xff]
        %v1410 = vld [vmem:[#allocation12 + $0x1e0] sm:$0xff]
        %v1411 = vld [vmem:[#allocation12 + $0x1e8] sm:$0xff]
        %v1412 = vld [vmem:[#allocation12 + $0x1f0] sm:$0xff]
        %v1413 = vld [vmem:[#allocation12 + $0x1f8] sm:$0xff]
        %v1478 = vunpack.c.l.b16 %v1350
        %v1479 = vunpack.c.h.b16 %v1350
        %v1480 = vunpack.c.l.b16 %v1351
        %v1481 = vunpack.c.h.b16 %v1351
        %v1482 = vunpack.c.l.b16 %v1352
        %v1483 = vunpack.c.h.b16 %v1352
        %v1484 = vunpack.c.l.b16 %v1353
        %v1485 = vunpack.c.h.b16 %v1353
        %v1486 = vunpack.c.l.b16 %v1354
        %v1487 = vunpack.c.h.b16 %v1354
        %v1488 = vunpack.c.l.b16 %v1355
        %v1489 = vunpack.c.h.b16 %v1355
        %v1490 = vunpack.c.l.b16 %v1356
        %v1491 = vunpack.c.h.b16 %v1356
        %v1492 = vunpack.c.l.b16 %v1357
        %v1493 = vunpack.c.h.b16 %v1357
        %v1494 = vunpack.c.l.b16 %v1358
        %v1495 = vunpack.c.h.b16 %v1358
        %v1496 = vunpack.c.l.b16 %v1359
        %v1497 = vunpack.c.h.b16 %v1359
        %v1498 = vunpack.c.l.b16 %v1360
        %v1499 = vunpack.c.h.b16 %v1360
        %v1500 = vunpack.c.l.b16 %v1361
        %v1501 = vunpack.c.h.b16 %v1361
        %v1502 = vunpack.c.l.b16 %v1362
        %v1503 = vunpack.c.h.b16 %v1362
        %v1504 = vunpack.c.l.b16 %v1363
        %v1505 = vunpack.c.h.b16 %v1363
        %v1506 = vunpack.c.l.b16 %v1364
        %v1507 = vunpack.c.h.b16 %v1364
        %v1508 = vunpack.c.l.b16 %v1365
        %v1509 = vunpack.c.h.b16 %v1365
        %v1510 = vunpack.c.l.b16 %v1366
        %v1511 = vunpack.c.h.b16 %v1366
        %v1512 = vunpack.c.l.b16 %v1367
        %v1513 = vunpack.c.h.b16 %v1367
        %v1514 = vunpack.c.l.b16 %v1368
        %v1515 = vunpack.c.h.b16 %v1368
        %v1516 = vunpack.c.l.b16 %v1369
        %v1517 = vunpack.c.h.b16 %v1369
        %v1518 = vunpack.c.l.b16 %v1370
        %v1519 = vunpack.c.h.b16 %v1370
        %v1520 = vunpack.c.l.b16 %v1371
        %v1521 = vunpack.c.h.b16 %v1371
        %v1522 = vunpack.c.l.b16 %v1372
        %v1523 = vunpack.c.h.b16 %v1372
        %v1524 = vunpack.c.l.b16 %v1373
        %v1525 = vunpack.c.h.b16 %v1373
        %v1526 = vunpack.c.l.b16 %v1374
        %v1527 = vunpack.c.h.b16 %v1374
        %v1528 = vunpack.c.l.b16 %v1375
        %v1529 = vunpack.c.h.b16 %v1375
        %v1530 = vunpack.c.l.b16 %v1376
        %v1531 = vunpack.c.h.b16 %v1376
        %v1532 = vunpack.c.l.b16 %v1377
        %v1533 = vunpack.c.h.b16 %v1377
        %v1534 = vunpack.c.l.b16 %v1378
        %v1535 = vunpack.c.h.b16 %v1378
        %v1536 = vunpack.c.l.b16 %v1379
        %v1537 = vunpack.c.h.b16 %v1379
        %v1538 = vunpack.c.l.b16 %v1380
        %v1539 = vunpack.c.h.b16 %v1380
        %v1540 = vunpack.c.l.b16 %v1381
        %v1541 = vunpack.c.h.b16 %v1381
        %v1542 = vunpack.c.l.b16 %v1382
        %v1543 = vunpack.c.h.b16 %v1382
        %v1544 = vunpack.c.l.b16 %v1383
        %v1545 = vunpack.c.h.b16 %v1383
        %v1546 = vunpack.c.l.b16 %v1384
        %v1547 = vunpack.c.h.b16 %v1384
        %v1548 = vunpack.c.l.b16 %v1385
        %v1549 = vunpack.c.h.b16 %v1385
        %v1550 = vunpack.c.l.b16 %v1386
        %v1551 = vunpack.c.h.b16 %v1386
        %v1552 = vunpack.c.l.b16 %v1387
        %v1553 = vunpack.c.h.b16 %v1387
        %v1554 = vunpack.c.l.b16 %v1388
        %v1555 = vunpack.c.h.b16 %v1388
        %v1556 = vunpack.c.l.b16 %v1389
        %v1557 = vunpack.c.h.b16 %v1389
        %v1558 = vunpack.c.l.b16 %v1390
        %v1559 = vunpack.c.h.b16 %v1390
        %v1560 = vunpack.c.l.b16 %v1391
        %v1561 = vunpack.c.h.b16 %v1391
        %v1562 = vunpack.c.l.b16 %v1392
        %v1563 = vunpack.c.h.b16 %v1392
        %v1564 = vunpack.c.l.b16 %v1393
        %v1565 = vunpack.c.h.b16 %v1393
        %v1566 = vunpack.c.l.b16 %v1394
        %v1567 = vunpack.c.h.b16 %v1394
        %v1568 = vunpack.c.l.b16 %v1395
        %v1569 = vunpack.c.h.b16 %v1395
        %v1570 = vunpack.c.l.b16 %v1396
        %v1571 = vunpack.c.h.b16 %v1396
        %v1572 = vunpack.c.l.b16 %v1397
        %v1573 = vunpack.c.h.b16 %v1397
        %v1574 = vunpack.c.l.b16 %v1398
        %v1575 = vunpack.c.h.b16 %v1398
        %v1576 = vunpack.c.l.b16 %v1399
        %v1577 = vunpack.c.h.b16 %v1399
        %v1578 = vunpack.c.l.b16 %v1400
        %v1579 = vunpack.c.h.b16 %v1400
        %v1580 = vunpack.c.l.b16 %v1401
        %v1581 = vunpack.c.h.b16 %v1401
        %v1582 = vunpack.c.l.b16 %v1402
        %v1583 = vunpack.c.h.b16 %v1402
        %v1584 = vunpack.c.l.b16 %v1403
        %v1585 = vunpack.c.h.b16 %v1403
        %v1586 = vunpack.c.l.b16 %v1404
        %v1587 = vunpack.c.h.b16 %v1404
        %v1588 = vunpack.c.l.b16 %v1405
        %v1589 = vunpack.c.h.b16 %v1405
        %v1590 = vunpack.c.l.b16 %v1406
        %v1591 = vunpack.c.h.b16 %v1406
        %v1592 = vunpack.c.l.b16 %v1407
        %v1593 = vunpack.c.h.b16 %v1407
        %v1594 = vunpack.c.l.b16 %v1408
        %v1595 = vunpack.c.h.b16 %v1408
        %v1596 = vunpack.c.l.b16 %v1409
        %v1597 = vunpack.c.h.b16 %v1409
        %v1598 = vunpack.c.l.b16 %v1410
        %v1599 = vunpack.c.h.b16 %v1410
        %v1600 = vunpack.c.l.b16 %v1411
        %v1601 = vunpack.c.h.b16 %v1411
        %v1602 = vunpack.c.l.b16 %v1412
        %v1603 = vunpack.c.h.b16 %v1412
        %v1604 = vunpack.c.l.b16 %v1413
        %v1605 = vunpack.c.h.b16 %v1413
        %v1606 = vpack.c.b16 %v1486, %v1478
        %v1607 = vpack.c.b16 %v1487, %v1479
        %v1608 = vpack.c.b16 %v1488, %v1480
        %v1609 = vpack.c.b16 %v1489, %v1481
        %v1610 = vpack.c.b16 %v1490, %v1482
        %v1611 = vpack.c.b16 %v1491, %v1483
        %v1612 = vpack.c.b16 %v1492, %v1484
        %v1613 = vpack.c.b16 %v1493, %v1485
        %v1614 = vpack.c.b16 %v1502, %v1494
        %v1615 = vpack.c.b16 %v1503, %v1495
        %v1616 = vpack.c.b16 %v1504, %v1496
        %v1617 = vpack.c.b16 %v1505, %v1497
        %v1618 = vpack.c.b16 %v1506, %v1498
        %v1619 = vpack.c.b16 %v1507, %v1499
        %v1620 = vpack.c.b16 %v1508, %v1500
        %v1621 = vpack.c.b16 %v1509, %v1501
        %v1622 = vpack.c.b16 %v1518, %v1510
        %v1623 = vpack.c.b16 %v1519, %v1511
        %v1624 = vpack.c.b16 %v1520, %v1512
        %v1625 = vpack.c.b16 %v1521, %v1513
        %v1626 = vpack.c.b16 %v1522, %v1514
        %v1627 = vpack.c.b16 %v1523, %v1515
        %v1628 = vpack.c.b16 %v1524, %v1516
        %v1629 = vpack.c.b16 %v1525, %v1517
        %v1630 = vpack.c.b16 %v1534, %v1526
        %v1631 = vpack.c.b16 %v1535, %v1527
        %v1632 = vpack.c.b16 %v1536, %v1528
        %v1633 = vpack.c.b16 %v1537, %v1529
        %v1634 = vpack.c.b16 %v1538, %v1530
        %v1635 = vpack.c.b16 %v1539, %v1531
        %v1636 = vpack.c.b16 %v1540, %v1532
        %v1637 = vpack.c.b16 %v1541, %v1533
        %v1638 = vpack.c.b16 %v1550, %v1542
        %v1639 = vpack.c.b16 %v1551, %v1543
        %v1640 = vpack.c.b16 %v1552, %v1544
        %v1641 = vpack.c.b16 %v1553, %v1545
        %v1642 = vpack.c.b16 %v1554, %v1546
        %v1643 = vpack.c.b16 %v1555, %v1547
        %v1644 = vpack.c.b16 %v1556, %v1548
        %v1645 = vpack.c.b16 %v1557, %v1549
        %v1646 = vpack.c.b16 %v1566, %v1558
        %v1647 = vpack.c.b16 %v1567, %v1559
        %v1648 = vpack.c.b16 %v1568, %v1560
        %v1649 = vpack.c.b16 %v1569, %v1561
        %v1650 = vpack.c.b16 %v1570, %v1562
        %v1651 = vpack.c.b16 %v1571, %v1563
        %v1652 = vpack.c.b16 %v1572, %v1564
        %v1653 = vpack.c.b16 %v1573, %v1565
        %v1654 = vpack.c.b16 %v1582, %v1574
        %v1655 = vpack.c.b16 %v1583, %v1575
        %v1656 = vpack.c.b16 %v1584, %v1576
        %v1657 = vpack.c.b16 %v1585, %v1577
        %v1658 = vpack.c.b16 %v1586, %v1578
        %v1659 = vpack.c.b16 %v1587, %v1579
        %v1660 = vpack.c.b16 %v1588, %v1580
        %v1661 = vpack.c.b16 %v1589, %v1581
        %v1662 = vpack.c.b16 %v1598, %v1590
        %v1663 = vpack.c.b16 %v1599, %v1591
        %v1664 = vpack.c.b16 %v1600, %v1592
        %v1665 = vpack.c.b16 %v1601, %v1593
        %v1666 = vpack.c.b16 %v1602, %v1594
        %v1667 = vpack.c.b16 %v1603, %v1595
        %v1668 = vpack.c.b16 %v1604, %v1596
        %v1669 = vpack.c.b16 %v1605, %v1597
        %1734 = vmatprep.subr.bf16.mxu0 %v1607
        %1735 = vmatpush1.bf16.msra.mxu0 %v1606
        %1736 = vmatprep.subr.bf16.mxu0 %v1615
        %1737 = vmatpush1.bf16.msra.mxu0 %v1614
        %1738 = vmatprep.subr.bf16.mxu0 %v1623
        %1739 = vmatpush1.bf16.msra.mxu0 %v1622
        %1740 = vmatprep.subr.bf16.mxu0 %v1631
        %1741 = vmatpush1.bf16.msra.mxu0 %v1630
        %1742 = vmatprep.subr.bf16.mxu0 %v1639
        %1743 = vmatpush1.bf16.msra.mxu0 %v1638
        %1744 = vmatprep.subr.bf16.mxu0 %v1647
        %1745 = vmatpush1.bf16.msra.mxu0 %v1646
        %1746 = vmatprep.subr.bf16.mxu0 %v1655
        %1747 = vmatpush1.bf16.msra.mxu0 %v1654
        %1748 = vmatprep.subr.bf16.mxu0 %v1663
        %1749 = vmatpush1.bf16.msra.mxu0 %v1662
        %1750 = vmatprep.subr.bf16.mxu0 0
        %1751 = vmatpush1.bf16.msra.mxu0 0
        %1752 = vmatprep.subr.bf16.mxu0 0
        %1753 = vmatpush1.bf16.msra.mxu0 0
        %1754 = vmatprep.subr.bf16.mxu0 0
        %1755 = vmatpush1.bf16.msra.mxu0 0
        %1756 = vmatprep.subr.bf16.mxu0 0
        %1757 = vmatpush1.bf16.msra.mxu0 0
        %1758 = vmatprep.subr.bf16.mxu0 0
        %1759 = vmatpush1.bf16.msra.mxu0 0
        %1760 = vmatprep.subr.bf16.mxu0 0
        %1761 = vmatpush1.bf16.msra.mxu0 0
        %1762 = vmatprep.subr.bf16.mxu0 0
        %1763 = vmatpush1.bf16.msra.mxu0 0
        %1764 = vmatprep.subr.bf16.mxu0 0
        %1765 = vmatpush1.bf16.msra.mxu0 0
        %1766 = vmatprep.mubr.bf16.mxu0 0
        %1767 = vmatmul.mubr.bf16.gmra.mrb[0].mxu0 %v1349
        %v1768 = vpop.f32.mrb[0].mxu0
        %v1769 = vadd.f32 0.0, %v1768
        %v1770 = vpop.f32.mrb[0].mxu0
        %v1771 = vadd.f32 0.0, %v1770
        %v1772 = vpop.f32.mrb[0].mxu0
        %v1773 = vpop.f32.mrb[0].mxu0
        %1774 = vdwg.mxu0
        %1775 = vmatprep.subr.bf16.mxu0 %v1609
        %1776 = vmatpush1.bf16.msra.mxu0 %v1608
        %1777 = vmatprep.subr.bf16.mxu0 %v1617
        %1778 = vmatpush1.bf16.msra.mxu0 %v1616
        %1779 = vmatprep.subr.bf16.mxu0 %v1625
        %1780 = vmatpush1.bf16.msra.mxu0 %v1624
        %1781 = vmatprep.subr.bf16.mxu0 %v1633
        %1782 = vmatpush1.bf16.msra.mxu0 %v1632
        %1783 = vmatprep.subr.bf16.mxu0 %v1641
        %1784 = vmatpush1.bf16.msra.mxu0 %v1640
        %1785 = vmatprep.subr.bf16.mxu0 %v1649
        %1786 = vmatpush1.bf16.msra.mxu0 %v1648
        %1787 = vmatprep.subr.bf16.mxu0 %v1657
        %1788 = vmatpush1.bf16.msra.mxu0 %v1656
        %1789 = vmatprep.subr.bf16.mxu0 %v1665
        %1790 = vmatpush1.bf16.msra.mxu0 %v1664
        %1791 = vmatprep.subr.bf16.mxu0 0
        %1792 = vmatpush1.bf16.msra.mxu0 0
        %1793 = vmatprep.subr.bf16.mxu0 0
        %1794 = vmatpush1.bf16.msra.mxu0 0
        %1795 = vmatprep.subr.bf16.mxu0 0
        %1796 = vmatpush1.bf16.msra.mxu0 0
        %1797 = vmatprep.subr.bf16.mxu0 0
        %1798 = vmatpush1.bf16.msra.mxu0 0
        %1799 = vmatprep.subr.bf16.mxu0 0
        %1800 = vmatpush1.bf16.msra.mxu0 0
        %1801 = vmatprep.subr.bf16.mxu0 0
        %1802 = vmatpush1.bf16.msra.mxu0 0
        %1803 = vmatprep.subr.bf16.mxu0 0
        %1804 = vmatpush1.bf16.msra.mxu0 0
        %1805 = vmatprep.subr.bf16.mxu0 0
        %1806 = vmatpush1.bf16.msra.mxu0 0
        %1807 = vmatprep.mubr.bf16.mxu0 0
        %1808 = vmatmul.mubr.bf16.gmra.mrb[0].mxu0 %v1349
        %v1809 = vpop.f32.mrb[0].mxu0
        %v1810 = vadd.f32 0.0, %v1809
        %v1811 = vpop.f32.mrb[0].mxu0
        %v1812 = vadd.f32 0.0, %v1811
        %v1813 = vpop.f32.mrb[0].mxu0
        %v1814 = vpop.f32.mrb[0].mxu0
        %1815 = vdwg.mxu0
        %1816 = vmatprep.subr.bf16.mxu0 %v1611
        %1817 = vmatpush1.bf16.msra.mxu0 %v1610
        %1818 = vmatprep.subr.bf16.mxu0 %v1619
        %1819 = vmatpush1.bf16.msra.mxu0 %v1618
        %1820 = vmatprep.subr.bf16.mxu0 %v1627
        %1821 = vmatpush1.bf16.msra.mxu0 %v1626
        %1822 = vmatprep.subr.bf16.mxu0 %v1635
        %1823 = vmatpush1.bf16.msra.mxu0 %v1634
        %1824 = vmatprep.subr.bf16.mxu0 %v1643
        %1825 = vmatpush1.bf16.msra.mxu0 %v1642
        %1826 = vmatprep.subr.bf16.mxu0 %v1651
        %1827 = vmatpush1.bf16.msra.mxu0 %v1650
        %1828 = vmatprep.subr.bf16.mxu0 %v1659
        %1829 = vmatpush1.bf16.msra.mxu0 %v1658
        %1830 = vmatprep.subr.bf16.mxu0 %v1667
        %1831 = vmatpush1.bf16.msra.mxu0 %v1666
        %1832 = vmatprep.subr.bf16.mxu0 0
        %1833 = vmatpush1.bf16.msra.mxu0 0
        %1834 = vmatprep.subr.bf16.mxu0 0
        %1835 = vmatpush1.bf16.msra.mxu0 0
        %1836 = vmatprep.subr.bf16.mxu0 0
        %1837 = vmatpush1.bf16.msra.mxu0 0
        %1838 = vmatprep.subr.bf16.mxu0 0
        %1839 = vmatpush1.bf16.msra.mxu0 0
        %1840 = vmatprep.subr.bf16.mxu0 0
        %1841 = vmatpush1.bf16.msra.mxu0 0
        %1842 = vmatprep.subr.bf16.mxu0 0
        %1843 = vmatpush1.bf16.msra.mxu0 0
        %1844 = vmatprep.subr.bf16.mxu0 0
        %1845 = vmatpush1.bf16.msra.mxu0 0
        %1846 = vmatprep.subr.bf16.mxu0 0
        %1847 = vmatpush1.bf16.msra.mxu0 0
        %1848 = vmatprep.mubr.bf16.mxu0 0
        %1849 = vmatmul.mubr.bf16.gmra.mrb[0].mxu0 %v1349
        %v1850 = vpop.f32.mrb[0].mxu0
        %v1851 = vadd.f32 0.0, %v1850
        %v1852 = vpop.f32.mrb[0].mxu0
        %v1853 = vadd.f32 0.0, %v1852
        %v1854 = vpop.f32.mrb[0].mxu0
        %v1855 = vpop.f32.mrb[0].mxu0
        %1856 = vdwg.mxu0
        %1857 = vmatprep.subr.bf16.mxu0 %v1613
        %1858 = vmatpush1.bf16.msra.mxu0 %v1612
        %1859 = vmatprep.subr.bf16.mxu0 %v1621
        %1860 = vmatpush1.bf16.msra.mxu0 %v1620
        %1861 = vmatprep.subr.bf16.mxu0 %v1629
        %1862 = vmatpush1.bf16.msra.mxu0 %v1628
        %1863 = vmatprep.subr.bf16.mxu0 %v1637
        %1864 = vmatpush1.bf16.msra.mxu0 %v1636
        %1865 = vmatprep.subr.bf16.mxu0 %v1645
        %1866 = vmatpush1.bf16.msra.mxu0 %v1644
        %1867 = vmatprep.subr.bf16.mxu0 %v1653
        %1868 = vmatpush1.bf16.msra.mxu0 %v1652
        %1869 = vmatprep.subr.bf16.mxu0 %v1661
        %1870 = vmatpush1.bf16.msra.mxu0 %v1660
        %1871 = vmatprep.subr.bf16.mxu0 %v1669
        %1872 = vmatpush1.bf16.msra.mxu0 %v1668
        %1873 = vmatprep.subr.bf16.mxu0 0
        %1874 = vmatpush1.bf16.msra.mxu0 0
        %1875 = vmatprep.subr.bf16.mxu0 0
        %1876 = vmatpush1.bf16.msra.mxu0 0
        %1877 = vmatprep.subr.bf16.mxu0 0
        %1878 = vmatpush1.bf16.msra.mxu0 0
        %1879 = vmatprep.subr.bf16.mxu0 0
        %1880 = vmatpush1.bf16.msra.mxu0 0
        %1881 = vmatprep.subr.bf16.mxu0 0
        %1882 = vmatpush1.bf16.msra.mxu0 0
        %1883 = vmatprep.subr.bf16.mxu0 0
        %1884 = vmatpush1.bf16.msra.mxu0 0
        %1885 = vmatprep.subr.bf16.mxu0 0
        %1886 = vmatpush1.bf16.msra.mxu0 0
        %1887 = vmatprep.subr.bf16.mxu0 0
        %1888 = vmatpush1.bf16.msra.mxu0 0
        %1889 = vmatprep.mubr.bf16.mxu0 0
        %1890 = vmatmul.mubr.bf16.gmra.mrb[0].mxu0 %v1349
        %v1891 = vpop.f32.mrb[0].mxu0
        %v1892 = vadd.f32 0.0, %v1891
        %v1893 = vpop.f32.mrb[0].mxu0
        %v1894 = vadd.f32 0.0, %v1893
        %v1895 = vpop.f32.mrb[0].mxu0
        %v1896 = vpop.f32.mrb[0].mxu0
        %1897 = vdwg.mxu0
        %v1898 = vxor.u32 %v1769, 2147483648
        %v1899 = vxor.u32 %v1771, 2147483648
        %v1900 = vxor.u32 %v1810, 2147483648
        %v1901 = vxor.u32 %v1812, 2147483648
        %v1902 = vmul.f32 %v1898, 1.442695
        %v1903 = vpow.pop %v1902
        %v1904 = vmul.f32 %v1899, 1.442695
        %v1905 = vpow.pop %v1904
        %v1906 = vmul.f32 %v1900, 1.442695
        %v1907 = vpow.pop %v1906
        %v1908 = vmul.f32 %v1901, 1.442695
        %v1909 = vpow.pop %v1908
        %v1910 = vadd.f32 %v1903, 1.0
        %v1911 = vadd.f32 %v1905, 1.0
        %v1912 = vadd.f32 %v1907, 1.0
        %v1913 = vadd.f32 %v1909, 1.0
        %v1914 = vrcp.pop %v1910
        %v1915 = vmul.f32 1.0, %v1914
        %v1916 = vrcp.pop %v1911
        %v1917 = vmul.f32 1.0, %v1916
        %v1918 = vrcp.pop %v1912
        %v1919 = vmul.f32 1.0, %v1918
        %v1920 = vrcp.pop %v1913
        %v1921 = vmul.f32 1.0, %v1920
        %v1922 = vmul.f32 %v1769, %v1915
        %v1923 = vmul.f32 %v1771, %v1917
        %v1924 = vmul.f32 %v1810, %v1919
        %v1925 = vmul.f32 %v1812, %v1921
        %v1926 = vmul.f32 %v1922, %v1851
        %v1927 = vmul.f32 %v1923, %v1853
        %v1928 = vmul.f32 %v1924, %v1892
        %v1929 = vmul.f32 %v1925, %v1894
        %v1930 = vpack.c.bf16 %v1926, %v1926
        %v1931 = vpack.c.bf16 %v1927, %v1927
        %v1932 = vpack.c.bf16 %v1928, %v1928
        %v1933 = vpack.c.bf16 %v1929, %v1929
        %v1934 = vld [vmem:[#allocation14] sm:$0xf]
        %v1935 = vld [vmem:[#allocation14 + $0x4] sm:$0xf]
        %v1936 = vld [vmem:[#allocation14 + $0x8] sm:$0xf]
        %v1937 = vld [vmem:[#allocation14 + $0xc] sm:$0xf]
        %v1938 = vld [vmem:[#allocation14 + $0x10] sm:$0xf]
        %v1939 = vld [vmem:[#allocation14 + $0x14] sm:$0xf]
        %v1940 = vld [vmem:[#allocation14 + $0x18] sm:$0xf]
        %v1941 = vld [vmem:[#allocation14 + $0x1c] sm:$0xf]
        %v1942 = vld [vmem:[#allocation14 + $0x20] sm:$0xf]
        %v1943 = vld [vmem:[#allocation14 + $0x24] sm:$0xf]
        %v1944 = vld [vmem:[#allocation14 + $0x28] sm:$0xf]
        %v1945 = vld [vmem:[#allocation14 + $0x2c] sm:$0xf]
        %v1946 = vld [vmem:[#allocation14 + $0x30] sm:$0xf]
        %v1947 = vld [vmem:[#allocation14 + $0x34] sm:$0xf]
        %v1948 = vld [vmem:[#allocation14 + $0x38] sm:$0xf]
        %v1949 = vld [vmem:[#allocation14 + $0x3c] sm:$0xf]
        %v1950 = vld [vmem:[#allocation14 + $0x40] sm:$0xf]
        %v1951 = vld [vmem:[#allocation14 + $0x44] sm:$0xf]
        %v1952 = vld [vmem:[#allocation14 + $0x48] sm:$0xf]
        %v1953 = vld [vmem:[#allocation14 + $0x4c] sm:$0xf]
        %v1954 = vld [vmem:[#allocation14 + $0x50] sm:$0xf]
        %v1955 = vld [vmem:[#allocation14 + $0x54] sm:$0xf]
        %v1956 = vld [vmem:[#allocation14 + $0x58] sm:$0xf]
        %v1957 = vld [vmem:[#allocation14 + $0x5c] sm:$0xf]
        %v1958 = vld [vmem:[#allocation14 + $0x60] sm:$0xf]
        %v1959 = vld [vmem:[#allocation14 + $0x64] sm:$0xf]
        %v1960 = vld [vmem:[#allocation14 + $0x68] sm:$0xf]
        %v1961 = vld [vmem:[#allocation14 + $0x6c] sm:$0xf]
        %v1962 = vld [vmem:[#allocation14 + $0x70] sm:$0xf]
        %v1963 = vld [vmem:[#allocation14 + $0x74] sm:$0xf]
        %v1964 = vld [vmem:[#allocation14 + $0x78] sm:$0xf]
        %v1965 = vld [vmem:[#allocation14 + $0x7c] sm:$0xf]
        %v1966 = vld [vmem:[#allocation14 + $0x80] sm:$0xf]
        %v1967 = vld [vmem:[#allocation14 + $0x84] sm:$0xf]
        %v1968 = vld [vmem:[#allocation14 + $0x88] sm:$0xf]
        %v1969 = vld [vmem:[#allocation14 + $0x8c] sm:$0xf]
        %v1970 = vld [vmem:[#allocation14 + $0x90] sm:$0xf]
        %v1971 = vld [vmem:[#allocation14 + $0x94] sm:$0xf]
        %v1972 = vld [vmem:[#allocation14 + $0x98] sm:$0xf]
        %v1973 = vld [vmem:[#allocation14 + $0x9c] sm:$0xf]
        %v1974 = vld [vmem:[#allocation14 + $0xa0] sm:$0xf]
        %v1975 = vld [vmem:[#allocation14 + $0xa4] sm:$0xf]
        %v1976 = vld [vmem:[#allocation14 + $0xa8] sm:$0xf]
        %v1977 = vld [vmem:[#allocation14 + $0xac] sm:$0xf]
        %v1978 = vld [vmem:[#allocation14 + $0xb0] sm:$0xf]
        %v1979 = vld [vmem:[#allocation14 + $0xb4] sm:$0xf]
        %v1980 = vld [vmem:[#allocation14 + $0xb8] sm:$0xf]
        %v1981 = vld [vmem:[#allocation14 + $0xbc] sm:$0xf]
        %v1982 = vld [vmem:[#allocation14 + $0xc0] sm:$0xf]
        %v1983 = vld [vmem:[#allocation14 + $0xc4] sm:$0xf]
        %v1984 = vld [vmem:[#allocation14 + $0xc8] sm:$0xf]
        %v1985 = vld [vmem:[#allocation14 + $0xcc] sm:$0xf]
        %v1986 = vld [vmem:[#allocation14 + $0xd0] sm:$0xf]
        %v1987 = vld [vmem:[#allocation14 + $0xd4] sm:$0xf]
        %v1988 = vld [vmem:[#allocation14 + $0xd8] sm:$0xf]
        %v1989 = vld [vmem:[#allocation14 + $0xdc] sm:$0xf]
        %v1990 = vld [vmem:[#allocation14 + $0xe0] sm:$0xf]
        %v1991 = vld [vmem:[#allocation14 + $0xe4] sm:$0xf]
        %v1992 = vld [vmem:[#allocation14 + $0xe8] sm:$0xf]
        %v1993 = vld [vmem:[#allocation14 + $0xec] sm:$0xf]
        %v1994 = vld [vmem:[#allocation14 + $0xf0] sm:$0xf]
        %v1995 = vld [vmem:[#allocation14 + $0xf4] sm:$0xf]
        %v1996 = vld [vmem:[#allocation14 + $0xf8] sm:$0xf]
        %v1997 = vld [vmem:[#allocation14 + $0xfc] sm:$0xf]
        %v2062 = vunpack.c.l.b16 %v1934
        %v2063 = vunpack.c.l.b16 %v1935
        %v2064 = vunpack.c.l.b16 %v1936
        %v2065 = vunpack.c.l.b16 %v1937
        %v2066 = vunpack.c.l.b16 %v1938
        %v2067 = vunpack.c.l.b16 %v1939
        %v2068 = vunpack.c.l.b16 %v1940
        %v2069 = vunpack.c.l.b16 %v1941
        %v2070 = vunpack.c.l.b16 %v1942
        %v2071 = vunpack.c.l.b16 %v1943
        %v2072 = vunpack.c.l.b16 %v1944
        %v2073 = vunpack.c.l.b16 %v1945
        %v2074 = vunpack.c.l.b16 %v1946
        %v2075 = vunpack.c.l.b16 %v1947
        %v2076 = vunpack.c.l.b16 %v1948
        %v2077 = vunpack.c.l.b16 %v1949
        %v2078 = vunpack.c.l.b16 %v1950
        %v2079 = vunpack.c.l.b16 %v1951
        %v2080 = vunpack.c.l.b16 %v1952
        %v2081 = vunpack.c.l.b16 %v1953
        %v2082 = vunpack.c.l.b16 %v1954
        %v2083 = vunpack.c.l.b16 %v1955
        %v2084 = vunpack.c.l.b16 %v1956
        %v2085 = vunpack.c.l.b16 %v1957
        %v2086 = vunpack.c.l.b16 %v1958
        %v2087 = vunpack.c.l.b16 %v1959
        %v2088 = vunpack.c.l.b16 %v1960
        %v2089 = vunpack.c.l.b16 %v1961
        %v2090 = vunpack.c.l.b16 %v1962
        %v2091 = vunpack.c.l.b16 %v1963
        %v2092 = vunpack.c.l.b16 %v1964
        %v2093 = vunpack.c.l.b16 %v1965
        %v2094 = vunpack.c.l.b16 %v1966
        %v2095 = vunpack.c.l.b16 %v1967
        %v2096 = vunpack.c.l.b16 %v1968
        %v2097 = vunpack.c.l.b16 %v1969
        %v2098 = vunpack.c.l.b16 %v1970
        %v2099 = vunpack.c.l.b16 %v1971
        %v2100 = vunpack.c.l.b16 %v1972
        %v2101 = vunpack.c.l.b16 %v1973
        %v2102 = vunpack.c.l.b16 %v1974
        %v2103 = vunpack.c.l.b16 %v1975
        %v2104 = vunpack.c.l.b16 %v1976
        %v2105 = vunpack.c.l.b16 %v1977
        %v2106 = vunpack.c.l.b16 %v1978
        %v2107 = vunpack.c.l.b16 %v1979
        %v2108 = vunpack.c.l.b16 %v1980
        %v2109 = vunpack.c.l.b16 %v1981
        %v2110 = vunpack.c.l.b16 %v1982
        %v2111 = vunpack.c.l.b16 %v1983
        %v2112 = vunpack.c.l.b16 %v1984
        %v2113 = vunpack.c.l.b16 %v1985
        %v2114 = vunpack.c.l.b16 %v1986
        %v2115 = vunpack.c.l.b16 %v1987
        %v2116 = vunpack.c.l.b16 %v1988
        %v2117 = vunpack.c.l.b16 %v1989
        %v2118 = vunpack.c.l.b16 %v1990
        %v2119 = vunpack.c.l.b16 %v1991
        %v2120 = vunpack.c.l.b16 %v1992
        %v2121 = vunpack.c.l.b16 %v1993
        %v2122 = vunpack.c.l.b16 %v1994
        %v2123 = vunpack.c.l.b16 %v1995
        %v2124 = vunpack.c.l.b16 %v1996
        %v2125 = vunpack.c.l.b16 %v1997
        %v2126 = vpack.c.b16 %v2063, %v2062
        %v2127 = vpack.c.b16 %v2065, %v2064
        %v2128 = vpack.c.b16 %v2067, %v2066
        %v2129 = vpack.c.b16 %v2069, %v2068
        %v2130 = vpack.c.b16 %v2071, %v2070
        %v2131 = vpack.c.b16 %v2073, %v2072
        %v2132 = vpack.c.b16 %v2075, %v2074
        %v2133 = vpack.c.b16 %v2077, %v2076
        %v2134 = vpack.c.b16 %v2079, %v2078
        %v2135 = vpack.c.b16 %v2081, %v2080
        %v2136 = vpack.c.b16 %v2083, %v2082
        %v2137 = vpack.c.b16 %v2085, %v2084
        %v2138 = vpack.c.b16 %v2087, %v2086
        %v2139 = vpack.c.b16 %v2089, %v2088
        %v2140 = vpack.c.b16 %v2091, %v2090
        %v2141 = vpack.c.b16 %v2093, %v2092
        %v2142 = vpack.c.b16 %v2095, %v2094
        %v2143 = vpack.c.b16 %v2097, %v2096
        %v2144 = vpack.c.b16 %v2099, %v2098
        %v2145 = vpack.c.b16 %v2101, %v2100
        %v2146 = vpack.c.b16 %v2103, %v2102
        %v2147 = vpack.c.b16 %v2105, %v2104
        %v2148 = vpack.c.b16 %v2107, %v2106
        %v2149 = vpack.c.b16 %v2109, %v2108
        %v2150 = vpack.c.b16 %v2111, %v2110
        %v2151 = vpack.c.b16 %v2113, %v2112
        %v2152 = vpack.c.b16 %v2115, %v2114
        %v2153 = vpack.c.b16 %v2117, %v2116
        %v2154 = vpack.c.b16 %v2119, %v2118
        %v2155 = vpack.c.b16 %v2121, %v2120
        %v2156 = vpack.c.b16 %v2123, %v2122
        %v2157 = vpack.c.b16 %v2125, %v2124
        %2190 = vmatprep.subr.bf16.mxu0 0
        %2191 = vmatpush1.bf16.msra.mxu0 %v2126
        %2192 = vmatprep.subr.bf16.mxu0 0
        %2193 = vmatpush1.bf16.msra.mxu0 %v2127
        %2194 = vmatprep.subr.bf16.mxu0 0
        %2195 = vmatpush1.bf16.msra.mxu0 %v2128
        %2196 = vmatprep.subr.bf16.mxu0 0
        %2197 = vmatpush1.bf16.msra.mxu0 %v2129
        %2198 = vmatprep.subr.bf16.mxu0 0
        %2199 = vmatpush1.bf16.msra.mxu0 %v2130
        %2200 = vmatprep.subr.bf16.mxu0 0
        %2201 = vmatpush1.bf16.msra.mxu0 %v2131
        %2202 = vmatprep.subr.bf16.mxu0 0
        %2203 = vmatpush1.bf16.msra.mxu0 %v2132
        %2204 = vmatprep.subr.bf16.mxu0 0
        %2205 = vmatpush1.bf16.msra.mxu0 %v2133
        %2206 = vmatprep.subr.bf16.mxu0 0
        %2207 = vmatpush1.bf16.msra.mxu0 %v2134
        %2208 = vmatprep.subr.bf16.mxu0 0
        %2209 = vmatpush1.bf16.msra.mxu0 %v2135
        %2210 = vmatprep.subr.bf16.mxu0 0
        %2211 = vmatpush1.bf16.msra.mxu0 %v2136
        %2212 = vmatprep.subr.bf16.mxu0 0
        %2213 = vmatpush1.bf16.msra.mxu0 %v2137
        %2214 = vmatprep.subr.bf16.mxu0 0
        %2215 = vmatpush1.bf16.msra.mxu0 %v2138
        %2216 = vmatprep.subr.bf16.mxu0 0
        %2217 = vmatpush1.bf16.msra.mxu0 %v2139
        %2218 = vmatprep.subr.bf16.mxu0 0
        %2219 = vmatpush1.bf16.msra.mxu0 %v2140
        %2220 = vmatprep.subr.bf16.mxu0 0
        %2221 = vmatpush1.bf16.msra.mxu0 %v2141
        %2222 = vmatprep.mubr.bf16.mxu0 %v1931
        %2223 = vmatmul.mubr.bf16.gmra.mrb[0].mxu0 %v1930
        %v2224 = vpop.f32.mrb[0].mxu0
        %v2225 = vadd.f32 0.0, %v2224
        %v2226 = vpop.f32.mrb[0].mxu0
        %v2227 = vpop.f32.mrb[0].mxu0
        %v2228 = vpop.f32.mrb[0].mxu0
        %2229 = vdwg.mxu0
        %2230 = vmatprep.subr.bf16.mxu0 0
        %2231 = vmatpush1.bf16.msra.mxu0 %v2142
        %2232 = vmatprep.subr.bf16.mxu0 0
        %2233 = vmatpush1.bf16.msra.mxu0 %v2143
        %2234 = vmatprep.subr.bf16.mxu0 0
        %2235 = vmatpush1.bf16.msra.mxu0 %v2144
        %2236 = vmatprep.subr.bf16.mxu0 0
        %2237 = vmatpush1.bf16.msra.mxu0 %v2145
        %2238 = vmatprep.subr.bf16.mxu0 0
        %2239 = vmatpush1.bf16.msra.mxu0 %v2146
        %2240 = vmatprep.subr.bf16.mxu0 0
        %2241 = vmatpush1.bf16.msra.mxu0 %v2147
        %2242 = vmatprep.subr.bf16.mxu0 0
        %2243 = vmatpush1.bf16.msra.mxu0 %v2148
        %2244 = vmatprep.subr.bf16.mxu0 0
        %2245 = vmatpush1.bf16.msra.mxu0 %v2149
        %2246 = vmatprep.subr.bf16.mxu0 0
        %2247 = vmatpush1.bf16.msra.mxu0 %v2150
        %2248 = vmatprep.subr.bf16.mxu0 0
        %2249 = vmatpush1.bf16.msra.mxu0 %v2151
        %2250 = vmatprep.subr.bf16.mxu0 0
        %2251 = vmatpush1.bf16.msra.mxu0 %v2152
        %2252 = vmatprep.subr.bf16.mxu0 0
        %2253 = vmatpush1.bf16.msra.mxu0 %v2153
        %2254 = vmatprep.subr.bf16.mxu0 0
        %2255 = vmatpush1.bf16.msra.mxu0 %v2154
        %2256 = vmatprep.subr.bf16.mxu0 0
        %2257 = vmatpush1.bf16.msra.mxu0 %v2155
        %2258 = vmatprep.subr.bf16.mxu0 0
        %2259 = vmatpush1.bf16.msra.mxu0 %v2156
        %2260 = vmatprep.subr.bf16.mxu0 0
        %2261 = vmatpush1.bf16.msra.mxu0 %v2157
        %2262 = vmatprep.mubr.bf16.mxu0 %v1933
        %2263 = vmatmul.mubr.bf16.gmra.mrb[0].mxu0 %v1932
        %v2264 = vpop.f32.mrb[0].mxu0
        %v2265 = vadd.f32 %v2225, %v2264
        %v2266 = vpop.f32.mrb[0].mxu0
        %v2267 = vpop.f32.mrb[0].mxu0
        %v2268 = vpop.f32.mrb[0].mxu0
        %2269 = vdwg.mxu0
        %v2270 = vadd.f32 %v1329, %v2265
        %2271 = vst [vmem:[%s477] sm:$0xff] %v2270
        %s2272 = sand.u32 %s254, 1
        %s2273 = scalar_lea.sflag [#allocation5], %s2272
        %s2274 = sand.u32 %s254, 1
        %s2275 = smul.addr %s2274, 8
        %s2276 = scalar_lea.vmem [#allocation15], %s2275
        // Predicated region
        $region89: #{tpu_custom_call.1} parent=55 // pred_check
          %p2277 = pneg %p264
        $region90: #{tpu_custom_call.1} parent=55 // pred_check_branch
          %2279 = sbr.rel (%p2277) target = $region92
        $region91: #{tpu_custom_call.1} parent=55 // pred_region
          %s2281 = ssub.s32 128, 128
          %2282 = vsyncadd %s2273, %s2281
          %s2283 = smul.addr %s35, 2
          %s2284 = sadd.s32 %s36, %s2283
          %s2285 = smul.addr %s2284, 128
          %s2286 = scalar_lea.hbm %s9, %s2285
          %s2288 = sshll.u32 %s2276, 4
          %s2289 = int_to_ptr.vmem [resolvable:$true] %s2288
          %2291 = dma.vmem_to_hbm [thread:$0]  %s2289, 128, %s2286, %s2273
        $region92: #{tpu_custom_call.1} parent=55 // pred_fallthru
          _
      $region56: #{tpu_custom_call.1} parent=5 // pred_fallthru
        _
      %p2292 = scmp.le.s32.totalorder 2, %s26
      // Predicated region
      $region93: #{tpu_custom_call.1} parent=5 // pred_check
        %p2293 = pneg %p2292
      $region94: #{tpu_custom_call.1} parent=5 // pred_check_branch
        %2295 = sbr.rel (%p2293) target = $region96
      $region95: #{tpu_custom_call.1} parent=5 // pred_region
        %s2296 = ssub.s32 %s26, 2
        // Predicated region
        $region97: #{tpu_custom_call.1} parent=95 // pred_check
          %p2297 = pneg %p270
        $region98: #{tpu_custom_call.1} parent=95 // pred_check_branch
          %2299 = sbr.rel (%p2297) target = $region100
        $region99: #{tpu_custom_call.1} parent=95 // pred_region
          %s2300 = sand.u32 %s255, 1
          %s2301 = scalar_lea.sflag [#allocation5], %s2300
          %s2302 = sand.u32 %s255, 1
          %s2303 = smul.addr %s2302, 8
          %s2304 = scalar_lea.vmem [#allocation15], %s2303
          %2305 = dma.done %s2301, 128
        $region100: #{tpu_custom_call.1} parent=95 // pred_fallthru
          _
      $region96: #{tpu_custom_call.1} parent=5 // pred_fallthru
        _
    $region6: #{tpu_custom_call.1} parent=1 // loop_footer
      %s30 = sadd.s32 1, %s26
    $region7: #{tpu_custom_call.1} parent=1 // loop_footer_branch
      %25 = sbr.rel target = $region3
    $region8: #{tpu_custom_call.1} parent=1 // loop_exit
      _
    %2306 = vsyncpa [#allocation4], 1
    %s2307 = scalar_lea.sflag [#allocation4], 1
    %2308 = vsyncpa %s2307, 1
    %2309 = vsyncpa [#allocation7], 1
    %s2310 = scalar_lea.sflag [#allocation7], 1
    %2311 = vsyncpa %s2310, 1
    %2312 = vsyncpa [#allocation10], 1
    %2313 = vsyncpa [#allocation13], 1
    %2314 = vsyncpa [#allocation5], 1
    %s2315 = scalar_lea.sflag [#allocation5], 1
    %2316 = vsyncpa %s2315, 1

</llo_original>
